<compile_context>
chip_gen: v7x
topology: tpu7x:2x2x1
jax: 0.10.0
libtpu: 0.0.40
codegen_flags: <defaults>
</compile_context>

<pallas_src>
import jax
import jax.numpy as jnp
from jax.experimental import pallas as pl
from jax.experimental.pallas import tpu as pltpu

latent_dim = 100            # as in the module spec
LATENT_PAD = 128            # zero-padded contraction dim (MXU/vreg friendly)

N_EXAMPLES = 2
SAMPLE_SIZE = 200           # small stand-in for the module's sample_size=8192

# (C_in, C_out, K, stride, activation).  stride == K (or L_in == 1) everywhere, which is
# what makes the "transposed conv == one matmul" identity hold (asserted below).
LAYER_CFG = [
    (latent_dim, 64, 4, 1, "relu"),   # L: 1  -> 4
    (64,         32, 4, 4, "relu"),   # L: 4  -> 16
    (32,         16, 4, 4, "relu"),   # L: 16 -> 64
    (16,          1, 4, 4, "tanh"),   # L: 64 -> 256
]
L_OUT = 256                 # final generated length before [:sample_size] truncation


# ---------------------------------------------------------------------------
# Single fused Pallas kernel: 4x (bf16 dot -> f32 acc, +bias, activation), all in VMEM.
# ---------------------------------------------------------------------------
def _fused_generator_kernel(x_ref,
                            w1_ref, b1_ref, w2_ref, b2_ref,
                            w3_ref, b3_ref, w4_ref, b4_ref,
                            o_ref):
    f32, bf16 = jnp.float32, jnp.bfloat16
    h = jnp.dot(x_ref[...], w1_ref[...], preferred_element_type=f32)
    h = jnp.maximum(h + b1_ref[...], 0.0)
    h = jnp.dot(h.astype(bf16), w2_ref[...], preferred_element_type=f32)
    h = jnp.maximum(h + b2_ref[...], 0.0)
    h = jnp.dot(h.astype(bf16), w3_ref[...], preferred_element_type=f32)
    h = jnp.maximum(h + b3_ref[...], 0.0)
    h = jnp.dot(h.astype(bf16), w4_ref[...], preferred_element_type=f32)
    o_ref[...] = jnp.tanh(h + b4_ref[...])        # lane-dense [N, 256] f32 store


def fused_generator(x, fused_params):
    """x: [N, LATENT_PAD] channels-last bf16 noise; returns [N, L_OUT] float32."""
    (w1, b1), (w2, b2), (w3, b3), (w4, b4) = fused_params
    n = x.shape[0]
    args = (x, w1, b1, w2, b2, w3, b3, w4, b4)
    full = lambda a: pl.BlockSpec(a.shape, lambda i: (0,) * a.ndim)   # whole-array blocks
    return pl.pallas_call(
        _fused_generator_kernel,
        out_shape=jax.ShapeDtypeStruct((n, L_OUT), jnp.float32),
        grid=(1,),
        in_specs=[full(a) for a in args],
        out_specs=pl.BlockSpec((n, L_OUT), lambda i: (0, 0)),
        compiler_params=pltpu.CompilerParams(dimension_semantics=("arbitrary",)),
        # TODO(synk): with the real sample_size=8192 the kron expansion of the late layers is
        # infeasible (weights would blow up); that regime needs per-layer position tiling
        # (grid axis over output positions, "parallel" for the second TensorCore on v7x).
    )(*args)


# ---------------------------------------------------------------------------
# Parameter init (p ~ N(0, 0.02), as in _initialize_weights) and one-time prep.
# ---------------------------------------------------------------------------
def init_params(key):
    params = []
    for (c_in, c_out, k, _, _) in LAYER_CFG:
        key, kw, kb = jax.random.split(key, 3)
        w = 0.02 * jax.random.normal(kw, (c_in, c_out, k), jnp.float32)   # ConvTranspose1d weight
        b = 0.02 * jax.random.normal(kb, (c_out,), jnp.float32)
        params.append((w, b))
    return params


def prepare_fused_params(params):
    """Fold every non-overlapping ConvTranspose1d into one 2-D matmul operand (done once).

    Columns are ordered (input-position l, kernel-tap k, out-channel c), i.e. the flat
    channels-last layout, so layer i's [N, L_in*K*C_out] output is -- with no transpose or
    reshape -- layer i+1's input.  Per-position weight sharing becomes kron(I_{L_in}, Wflat).
    Weights are stored bf16 (halves HBM traffic); biases stay f32.
    """
    fused = []
    l_in = 1
    for (w, b), (c_in, c_out, k, stride, _) in zip(params, LAYER_CFG):
        assert stride == k or l_in == 1, "matmul identity requires stride==K or L_in==1"
        wflat = jnp.transpose(w, (0, 2, 1)).reshape(c_in, k * c_out)   # cols = (k, c_out)
        if l_in > 1:
            wflat = jnp.kron(jnp.eye(l_in, dtype=w.dtype), wflat)      # block-diag over positions
        bflat = jnp.tile(b, l_in * k).reshape(1, l_in * k * c_out)     # tile (not repeat!)
        fused.append((wflat, bflat))
        l_in *= k
    # Zero-pad layer 1's contraction dim (latent_dim=100 -> 128); zeros contribute nothing.
    w1, b1 = fused[0]
    w1 = jnp.pad(w1, ((0, LATENT_PAD - w1.shape[0]), (0, 0)))
    fused[0] = (w1, b1)
    return tuple((w.astype(jnp.bfloat16), b.astype(jnp.float32)) for (w, b) in fused)


def prepare_noise(noise):
    """Frozen noise (N, latent_dim, 1) -> padded channels-last bf16 (N, LATENT_PAD). Once."""
    x = noise[:, :, 0]
    x = jnp.pad(x, ((0, 0), (0, LATENT_PAD - x.shape[1])))
    return x.astype(jnp.bfloat16)


# ---------------------------------------------------------------------------
# forward(): input is ignored (as in the module); frozen noise -> generator -> truncate.
# ---------------------------------------------------------------------------
@jax.jit
def forward(_ignored, fused_params, noise_padded):
    y = fused_generator(noise_padded, fused_params)               # [N, 256] lane-dense f32
    return y[:, None, :SAMPLE_SIZE]                               # NCL, [..., :sample_size]


# Pure-JAX f32 reference (einsum form of ConvTranspose1d with stride == K) for validation.
def reference_forward(params, noise):
    x = noise                                                     # [N, C, L]
    for (w, b), (_, _, k, _, act) in zip(params, LAYER_CFG):
        n, _, l = x.shape
        c_out = w.shape[1]
        y = jnp.einsum("ncl,cok->nolk", x, w).reshape(n, c_out, l * k) + b[None, :, None]
        x = jnp.maximum(y, 0.0) if act == "relu" else jnp.tanh(y)
    return x[..., :SAMPLE_SIZE]


if __name__ == "__main__":
    key = jax.random.PRNGKey(0)
    k_noise, k_params, k_dummy = jax.random.split(key, 3)

    # Frozen noise ~ U(0, 0.1), shape (n_examples, latent_dim, 1) as in __init__.
    noise = jax.random.uniform(
        k_noise, (N_EXAMPLES, latent_dim, 1), jnp.float32, 0.0, 0.1
    )
    params = init_params(k_params)
    fused_params = prepare_fused_params(params)
    noise_padded = prepare_noise(noise)

    # The forward() argument is ignored by the module; pass a dummy tensor.
    dummy = jax.random.normal(k_dummy, (N_EXAMPLES, 4, 16, 16), jnp.float32)

    out = jax.block_until_ready(forward(dummy, fused_params, noise_padded))

    assert out.shape == (N_EXAMPLES, 1, SAMPLE_SIZE), out.shape
    assert out.dtype == jnp.float32
    assert bool(jnp.all(jnp.isfinite(out)))

    ref = jax.block_until_ready(reference_forward(params, noise))
    assert ref.shape == out.shape
    # bf16 weight storage + bf16 activation casts keep |err| ~ 1e-4 on outputs of |~0.02|.
    assert bool(jnp.allclose(out, ref, atol=2e-3, rtol=2e-2)), \
        float(jnp.max(jnp.abs(out - ref)))

    print("KERNEL_OK")
</pallas_src>

<mosaic_0001>
module attributes {stable_mosaic.version = 11 : i64} {
  func.func @_fused_generator_kernel(%arg0: i32, %arg1: memref<2x128xbf16, #tpu.memory_space<vmem>>, %arg2: memref<128x256xbf16, #tpu.memory_space<vmem>>, %arg3: memref<1x256xf32, #tpu.memory_space<vmem>>, %arg4: memref<256x512xbf16, #tpu.memory_space<vmem>>, %arg5: memref<1x512xf32, #tpu.memory_space<vmem>>, %arg6: memref<512x1024xbf16, #tpu.memory_space<vmem>>, %arg7: memref<1x1024xf32, #tpu.memory_space<vmem>>, %arg8: memref<1024x256xbf16, #tpu.memory_space<vmem>>, %arg9: memref<1x256xf32, #tpu.memory_space<vmem>>, %arg10: memref<2x256xf32, #tpu.memory_space<vmem>>) attributes {dimension_semantics = [#tpu.dimension_semantics<arbitrary>], iteration_bounds = array<i64: 1>, scalar_prefetch = 0 : i64, scratch_operands = 0 : i64, tpu.core_type = #tpu.core_type<tc>, window_params = [{pipeline_mode = #tpu.pipeline_mode<synchronous>, transform_indices = @transform_0, window_bounds = array<i64: 2, 128>}, {pipeline_mode = #tpu.pipeline_mode<synchronous>, transform_indices = @transform_1, window_bounds = array<i64: 128, 256>}, {pipeline_mode = #tpu.pipeline_mode<synchronous>, transform_indices = @transform_2, window_bounds = array<i64: 1, 256>}, {pipeline_mode = #tpu.pipeline_mode<synchronous>, transform_indices = @transform_3, window_bounds = array<i64: 256, 512>}, {pipeline_mode = #tpu.pipeline_mode<synchronous>, transform_indices = @transform_4, window_bounds = array<i64: 1, 512>}, {pipeline_mode = #tpu.pipeline_mode<synchronous>, transform_indices = @transform_5, window_bounds = array<i64: 512, 1024>}, {pipeline_mode = #tpu.pipeline_mode<synchronous>, transform_indices = @transform_6, window_bounds = array<i64: 1, 1024>}, {pipeline_mode = #tpu.pipeline_mode<synchronous>, transform_indices = @transform_7, window_bounds = array<i64: 1024, 256>}, {pipeline_mode = #tpu.pipeline_mode<synchronous>, transform_indices = @transform_8, window_bounds = array<i64: 1, 256>}, {pipeline_mode = #tpu.pipeline_mode<synchronous>, transform_indices = @transform_9, window_bounds = array<i64: 2, 256>}]} {
    %c0 = arith.constant 0 : index
    %c0_0 = arith.constant 0 : index
    %0 = vector.load %arg1[%c0, %c0_0] : memref<2x128xbf16, #tpu.memory_space<vmem>>, vector<2x128xbf16>
    %c0_1 = arith.constant 0 : index
    %c0_2 = arith.constant 0 : index
    %1 = vector.load %arg2[%c0_1, %c0_2] : memref<128x256xbf16, #tpu.memory_space<vmem>>, vector<128x256xbf16>
    %cst = arith.constant dense<0.000000e+00> : vector<2x256xf32>
    %2 = tpu.matmul %0, %1, %cst {dimension_numbers = #tpu.dot_dimension_numbers<[1], [0], [0], [1], [0, 0, 1, 1], [], []>} : vector<2x128xbf16>, vector<128x256xbf16>, vector<2x256xf32> -> vector<2x256xf32>
    %c0_3 = arith.constant 0 : index
    %c0_4 = arith.constant 0 : index
    %3 = vector.load %arg3[%c0_3, %c0_4] : memref<1x256xf32, #tpu.memory_space<vmem>>, vector<1x256xf32>
    %4 = vector.broadcast %3 : vector<1x256xf32> to vector<2x256xf32>
    %5 = arith.addf %2, %4 : vector<2x256xf32>
    %cst_5 = arith.constant 0.000000e+00 : f32
    %6 = vector.broadcast %cst_5 : f32 to vector<2x256xf32>
    %7 = arith.maximumf %5, %6 : vector<2x256xf32>
    %8 = arith.truncf %7 : vector<2x256xf32> to vector<2x256xbf16>
    %c0_6 = arith.constant 0 : index
    %c0_7 = arith.constant 0 : index
    %9 = vector.load %arg4[%c0_6, %c0_7] : memref<256x512xbf16, #tpu.memory_space<vmem>>, vector<256x512xbf16>
    %cst_8 = arith.constant dense<0.000000e+00> : vector<2x512xf32>
    %10 = tpu.matmul %8, %9, %cst_8 {dimension_numbers = #tpu.dot_dimension_numbers<[1], [0], [0], [1], [0, 0, 1, 1], [], []>} : vector<2x256xbf16>, vector<256x512xbf16>, vector<2x512xf32> -> vector<2x512xf32>
    %c0_9 = arith.constant 0 : index
    %c0_10 = arith.constant 0 : index
    %11 = vector.load %arg5[%c0_9, %c0_10] : memref<1x512xf32, #tpu.memory_space<vmem>>, vector<1x512xf32>
    %12 = vector.broadcast %11 : vector<1x512xf32> to vector<2x512xf32>
    %13 = arith.addf %10, %12 : vector<2x512xf32>
    %cst_11 = arith.constant 0.000000e+00 : f32
    %14 = vector.broadcast %cst_11 : f32 to vector<2x512xf32>
    %15 = arith.maximumf %13, %14 : vector<2x512xf32>
    %16 = arith.truncf %15 : vector<2x512xf32> to vector<2x512xbf16>
    %c0_12 = arith.constant 0 : index
    %c0_13 = arith.constant 0 : index
    %17 = vector.load %arg6[%c0_12, %c0_13] : memref<512x1024xbf16, #tpu.memory_space<vmem>>, vector<512x1024xbf16>
    %cst_14 = arith.constant dense<0.000000e+00> : vector<2x1024xf32>
    %18 = tpu.matmul %16, %17, %cst_14 {dimension_numbers = #tpu.dot_dimension_numbers<[1], [0], [0], [1], [0, 0, 1, 1], [], []>} : vector<2x512xbf16>, vector<512x1024xbf16>, vector<2x1024xf32> -> vector<2x1024xf32>
    %c0_15 = arith.constant 0 : index
    %c0_16 = arith.constant 0 : index
    %19 = vector.load %arg7[%c0_15, %c0_16] : memref<1x1024xf32, #tpu.memory_space<vmem>>, vector<1x1024xf32>
    %20 = vector.broadcast %19 : vector<1x1024xf32> to vector<2x1024xf32>
    %21 = arith.addf %18, %20 : vector<2x1024xf32>
    %cst_17 = arith.constant 0.000000e+00 : f32
    %22 = vector.broadcast %cst_17 : f32 to vector<2x1024xf32>
    %23 = arith.maximumf %21, %22 : vector<2x1024xf32>
    %24 = arith.truncf %23 : vector<2x1024xf32> to vector<2x1024xbf16>
    %c0_18 = arith.constant 0 : index
    %c0_19 = arith.constant 0 : index
    %25 = vector.load %arg8[%c0_18, %c0_19] : memref<1024x256xbf16, #tpu.memory_space<vmem>>, vector<1024x256xbf16>
    %cst_20 = arith.constant dense<0.000000e+00> : vector<2x256xf32>
    %26 = tpu.matmul %24, %25, %cst_20 {dimension_numbers = #tpu.dot_dimension_numbers<[1], [0], [0], [1], [0, 0, 1, 1], [], []>} : vector<2x1024xbf16>, vector<1024x256xbf16>, vector<2x256xf32> -> vector<2x256xf32>
    %c0_21 = arith.constant 0 : index
    %c0_22 = arith.constant 0 : index
    %27 = vector.load %arg9[%c0_21, %c0_22] : memref<1x256xf32, #tpu.memory_space<vmem>>, vector<1x256xf32>
    %28 = vector.broadcast %27 : vector<1x256xf32> to vector<2x256xf32>
    %29 = arith.addf %26, %28 : vector<2x256xf32>
    %30 = math.tanh %29 : vector<2x256xf32>
    %c0_23 = arith.constant 0 : index
    %c0_24 = arith.constant 0 : index
    %31 = vector.load %arg10[%c0_23, %c0_24] : memref<2x256xf32, #tpu.memory_space<vmem>>, vector<2x256xf32>
    tpu.vector_store %arg10[%c0_23, %c0_24], %30 {strides = array<i32>} : memref<2x256xf32, #tpu.memory_space<vmem>>, vector<2x256xf32>,
    return
  }
  func.func @transform_0(%arg0: i32) -> (i32, i32) {
    %c0_i32 = arith.constant 0 : i32
    %c0_i32_0 = arith.constant 0 : i32
    %c0_i32_1 = arith.constant 0 : i32
    return %c0_i32, %c0_i32_0 : i32, i32
  }
  func.func @transform_1(%arg0: i32) -> (i32, i32) {
    %c0_i32 = arith.constant 0 : i32
    %c0_i32_0 = arith.constant 0 : i32
    %c0_i32_1 = arith.constant 0 : i32
    return %c0_i32, %c0_i32_0 : i32, i32
  }
  func.func @transform_2(%arg0: i32) -> (i32, i32) {
    %c0_i32 = arith.constant 0 : i32
    %c0_i32_0 = arith.constant 0 : i32
    %c0_i32_1 = arith.constant 0 : i32
    return %c0_i32, %c0_i32_0 : i32, i32
  }
  func.func @transform_3(%arg0: i32) -> (i32, i32) {
    %c0_i32 = arith.constant 0 : i32
    %c0_i32_0 = arith.constant 0 : i32
    %c0_i32_1 = arith.constant 0 : i32
    return %c0_i32, %c0_i32_0 : i32, i32
  }
  func.func @transform_4(%arg0: i32) -> (i32, i32) {
    %c0_i32 = arith.constant 0 : i32
    %c0_i32_0 = arith.constant 0 : i32
    %c0_i32_1 = arith.constant 0 : i32
    return %c0_i32, %c0_i32_0 : i32, i32
  }
  func.func @transform_5(%arg0: i32) -> (i32, i32) {
    %c0_i32 = arith.constant 0 : i32
    %c0_i32_0 = arith.constant 0 : i32
    %c0_i32_1 = arith.constant 0 : i32
    return %c0_i32, %c0_i32_0 : i32, i32
  }
  func.func @transform_6(%arg0: i32) -> (i32, i32) {
    %c0_i32 = arith.constant 0 : i32
    %c0_i32_0 = arith.constant 0 : i32
    %c0_i32_1 = arith.constant 0 : i32
    return %c0_i32, %c0_i32_0 : i32, i32
  }
  func.func @transform_7(%arg0: i32) -> (i32, i32) {
    %c0_i32 = arith.constant 0 : i32
    %c0_i32_0 = arith.constant 0 : i32
    %c0_i32_1 = arith.constant 0 : i32
    return %c0_i32, %c0_i32_0 : i32, i32
  }
  func.func @transform_8(%arg0: i32) -> (i32, i32) {
    %c0_i32 = arith.constant 0 : i32
    %c0_i32_0 = arith.constant 0 : i32
    %c0_i32_1 = arith.constant 0 : i32
    return %c0_i32, %c0_i32_0 : i32, i32
  }
  func.func @transform_9(%arg0: i32) -> (i32, i32) {
    %c0_i32 = arith.constant 0 : i32
    %c0_i32_0 = arith.constant 0 : i32
    %c0_i32_1 = arith.constant 0 : i32
    return %c0_i32, %c0_i32_0 : i32, i32
  }
}

</mosaic_0001>

<llo_original>
// kernel: forward.1
$region0: #{forward.1}
  #allocation0 [shape = 'u32[]', space=smem, size = 0x4, offset = 0x4, fixed_abs, tag = 'smem constant byte address 0x4 - core index']
  #allocation1 [shape = 'u32[144,128]{1,0:T(1,128)}', space=vmem, size = 0x12000, scoped, tag = 'internal scratch']
  %s0 = inlined_call_operand.vmem [shape: bf16[2,128], index: 0, kind: input, shape index: {}]
  %s1 = inlined_call_operand.hbm [shape: bf16[128,256], index: 1, kind: input, shape index: {}]
  %s2 = inlined_call_operand.vmem [shape: f32[1,256], index: 2, kind: input, shape index: {}]
  %s3 = inlined_call_operand.hbm [shape: bf16[256,512], index: 3, kind: input, shape index: {}]
  %s4 = inlined_call_operand.vmem [shape: f32[1,512], index: 4, kind: input, shape index: {}]
  %s5 = inlined_call_operand.hbm [shape: bf16[512,1024], index: 5, kind: input, shape index: {}]
  %s6 = inlined_call_operand.vmem [shape: f32[1,1024], index: 6, kind: input, shape index: {}]
  %s7 = inlined_call_operand.hbm [shape: bf16[1024,256], index: 7, kind: input, shape index: {}]
  %s8 = inlined_call_operand.vmem [shape: f32[1,256], index: 8, kind: input, shape index: {}]
  %s9 = inlined_call_operand.vmem [shape: f32[2,256], index: 9, kind: output, shape index: {}]
  %s10 = sld [smem:[#allocation0]]
  $region62: #{forward.1} parent=0
    _
  %s12 = ssub.s32 1, %s10
  %s13 = scalar_select 0, %s12, %s10
  $region1: #{forward.1} parent=0
    #allocation2 [shape = 'u8[65536]{0}', space=vmem, size = 0x10000, scoped, tag = 'input window, operand 1, single buffered']
    #allocation3 [shape = 's32[1]{0}', space=sflag, size = 0x4, scoped, tag = 'scoped memory for forward.1']
    #allocation4 [shape = 'u8[262144]{0}', space=vmem, size = 0x40000, scoped, tag = 'input window, operand 3, single buffered']
    #allocation5 [shape = 's32[1]{0}', space=sflag, size = 0x4, scoped, tag = 'scoped memory for forward.1']
    #allocation6 [shape = 'u8[1048576]{0}', space=vmem, size = 0x100000, scoped, tag = 'input window, operand 5, single buffered']
    #allocation7 [shape = 'u8[524288]{0}', space=vmem, size = 0x80000, scoped, tag = 'input window, operand 7, single buffered']
    #allocation8 [shape = 's32[1]{0}', space=sflag, size = 0x4, scoped, tag = 'scoped memory for forward.1']
    %14 = vsyncpa [#allocation3], 0
    %15 = vsyncpa [#allocation5], 0
    %16 = vsyncpa [#allocation8], 0
    // Predicated region
    $region2: #{forward.1} parent=1 // pred_check
      _
    $region3: #{forward.1} parent=1 // pred_check_branch
      %18 = sbr.rel (0) target = $region5
    $region4: #{forward.1} parent=1 // pred_region
      _
    $region5: #{forward.1} parent=1 // pred_fallthru
      _
    // Predicated region
    $region6: #{forward.1} parent=1 // pred_check
      _
    $region7: #{forward.1} parent=1 // pred_check_branch
      %20 = sbr.rel (0) target = $region9
    $region8: #{forward.1} parent=1 // pred_region
      %s22 = ssub.s32 2048, 2048
      %23 = vsyncadd [#allocation3], %s22
      %s24 = sshll.u32 [#allocation2], 4
      %s25 = int_to_ptr.vmem [resolvable:$true] %s24
      %30 = dma.hbm_to_vmem [thread:$0]  %s1, 2048, %s25, [#allocation3], 128, 128, 8
    $region9: #{forward.1} parent=1 // pred_fallthru
      _
    // Predicated region
    $region10: #{forward.1} parent=1 // pred_check
      _
    $region11: #{forward.1} parent=1 // pred_check_branch
      %32 = sbr.rel (0) target = $region13
    $region12: #{forward.1} parent=1 // pred_region
      _
    $region13: #{forward.1} parent=1 // pred_fallthru
      _
    // Predicated region
    $region14: #{forward.1} parent=1 // pred_check
      _
    $region15: #{forward.1} parent=1 // pred_check_branch
      %34 = sbr.rel (0) target = $region17
    $region16: #{forward.1} parent=1 // pred_region
      %s36 = ssub.s32 8192, 8192
      %37 = vsyncadd [#allocation5], %s36
      %s38 = sshll.u32 [#allocation4], 4
      %s39 = int_to_ptr.vmem [resolvable:$true] %s38
      %44 = dma.hbm_to_vmem [thread:$0]  %s3, 8192, %s39, [#allocation5], 256, 256, 16
    $region17: #{forward.1} parent=1 // pred_fallthru
      _
    // Predicated region
    $region18: #{forward.1} parent=1 // pred_check
      _
    $region19: #{forward.1} parent=1 // pred_check_branch
      %46 = sbr.rel (0) target = $region21
    $region20: #{forward.1} parent=1 // pred_region
      _
    $region21: #{forward.1} parent=1 // pred_fallthru
      _
    // Predicated region
    $region22: #{forward.1} parent=1 // pred_check
      _
    $region23: #{forward.1} parent=1 // pred_check_branch
      %48 = sbr.rel (0) target = $region25
    $region24: #{forward.1} parent=1 // pred_region
      %s50 = ssub.s32 32768, 32768
      %51 = vsyncadd [#allocation5], %s50
      %s52 = sshll.u32 [#allocation6], 4
      %s53 = int_to_ptr.vmem [resolvable:$true] %s52
      %58 = dma.hbm_to_vmem [thread:$0]  %s5, 32768, %s53, [#allocation5], 512, 512, 32
    $region25: #{forward.1} parent=1 // pred_fallthru
      _
    // Predicated region
    $region26: #{forward.1} parent=1 // pred_check
      _
    $region27: #{forward.1} parent=1 // pred_check_branch
      %60 = sbr.rel (0) target = $region29
    $region28: #{forward.1} parent=1 // pred_region
      _
    $region29: #{forward.1} parent=1 // pred_fallthru
      _
    // Predicated region
    $region30: #{forward.1} parent=1 // pred_check
      _
    $region31: #{forward.1} parent=1 // pred_check_branch
      %62 = sbr.rel (0) target = $region33
    $region32: #{forward.1} parent=1 // pred_region
      %s64 = ssub.s32 16384, 16384
      %65 = vsyncadd [#allocation8], %s64
      %s66 = sshll.u32 [#allocation7], 4
      %s67 = int_to_ptr.vmem [resolvable:$true] %s66
      %72 = dma.hbm_to_vmem [thread:$0]  %s7, 16384, %s67, [#allocation8], 128, 128, 8
    $region33: #{forward.1} parent=1 // pred_fallthru
      _
    // Predicated region
    $region34: #{forward.1} parent=1 // pred_check
      _
    $region35: #{forward.1} parent=1 // pred_check_branch
      %74 = sbr.rel (0) target = $region37
    $region36: #{forward.1} parent=1 // pred_region
      _
    $region37: #{forward.1} parent=1 // pred_fallthru
      _
    // Predicated region
    $region38: #{forward.1} parent=1 // pred_check
      _
    $region39: #{forward.1} parent=1 // pred_check_branch
      %76 = sbr.rel (0) target = $region41
    $region40: #{forward.1} parent=1 // pred_region
      %77 = dma.done [#allocation3], 2048
    $region41: #{forward.1} parent=1 // pred_fallthru
      _
    // Predicated region
    $region42: #{forward.1} parent=1 // pred_check
      _
    $region43: #{forward.1} parent=1 // pred_check_branch
      %79 = sbr.rel (0) target = $region45
    $region44: #{forward.1} parent=1 // pred_region
      %80 = dma.done [#allocation5], 8192
    $region45: #{forward.1} parent=1 // pred_fallthru
      _
    // Predicated region
    $region46: #{forward.1} parent=1 // pred_check
      _
    $region47: #{forward.1} parent=1 // pred_check_branch
      %82 = sbr.rel (0) target = $region49
    $region48: #{forward.1} parent=1 // pred_region
      %83 = dma.done [#allocation5], 32768
    $region49: #{forward.1} parent=1 // pred_fallthru
      _
    // Predicated region
    $region50: #{forward.1} parent=1 // pred_check
      _
    $region51: #{forward.1} parent=1 // pred_check_branch
      %85 = sbr.rel (0) target = $region53
    $region52: #{forward.1} parent=1 // pred_region
      %86 = dma.done [#allocation8], 16384
    $region53: #{forward.1} parent=1 // pred_fallthru
      _
    %v88 = vld [vmem:[%s0] sm:$0x1]
    %v89 = vld [vmem:[#allocation2] sm:$0xff]
    %v90 = vld [vmem:[#allocation2 + $0x8] sm:$0xff]
    %v91 = vld [vmem:[#allocation2 + $0x10] sm:$0xff]
    %v92 = vld [vmem:[#allocation2 + $0x18] sm:$0xff]
    %v93 = vld [vmem:[#allocation2 + $0x20] sm:$0xff]
    %v94 = vld [vmem:[#allocation2 + $0x28] sm:$0xff]
    %v95 = vld [vmem:[#allocation2 + $0x30] sm:$0xff]
    %v96 = vld [vmem:[#allocation2 + $0x38] sm:$0xff]
    %v97 = vld [vmem:[#allocation2 + $0x40] sm:$0xff]
    %v98 = vld [vmem:[#allocation2 + $0x48] sm:$0xff]
    %v99 = vld [vmem:[#allocation2 + $0x50] sm:$0xff]
    %v100 = vld [vmem:[#allocation2 + $0x58] sm:$0xff]
    %v101 = vld [vmem:[#allocation2 + $0x60] sm:$0xff]
    %v102 = vld [vmem:[#allocation2 + $0x68] sm:$0xff]
    %v103 = vld [vmem:[#allocation2 + $0x70] sm:$0xff]
    %v104 = vld [vmem:[#allocation2 + $0x78] sm:$0xff]
    %v105 = vld [vmem:[%s2] sm:$0x3]
    %v107 = vlaneseq
    %v108 = vshrl.u32 %v107, 7
    %v109 = vsub.s32 0, %v108
    %v110 = vrot.slane %v105, %v109
    %v111 = vlaneseq
    %v112 = vshrl.u32 %v111, 7
    %v113 = vsub.s32 1, %v112
    %v114 = vrot.slane %v105, %v113
    %v133 = vunpack.c.l.b16 %v89
    %v134 = vunpack.c.h.b16 %v89
    %v135 = vunpack.c.l.b16 %v90
    %v136 = vunpack.c.h.b16 %v90
    %v137 = vunpack.c.l.b16 %v91
    %v138 = vunpack.c.h.b16 %v91
    %v139 = vunpack.c.l.b16 %v92
    %v140 = vunpack.c.h.b16 %v92
    %v141 = vunpack.c.l.b16 %v93
    %v142 = vunpack.c.h.b16 %v93
    %v143 = vunpack.c.l.b16 %v94
    %v144 = vunpack.c.h.b16 %v94
    %v145 = vunpack.c.l.b16 %v95
    %v146 = vunpack.c.h.b16 %v95
    %v147 = vunpack.c.l.b16 %v96
    %v148 = vunpack.c.h.b16 %v96
    %v149 = vunpack.c.l.b16 %v97
    %v150 = vunpack.c.h.b16 %v97
    %v151 = vunpack.c.l.b16 %v98
    %v152 = vunpack.c.h.b16 %v98
    %v153 = vunpack.c.l.b16 %v99
    %v154 = vunpack.c.h.b16 %v99
    %v155 = vunpack.c.l.b16 %v100
    %v156 = vunpack.c.h.b16 %v100
    %v157 = vunpack.c.l.b16 %v101
    %v158 = vunpack.c.h.b16 %v101
    %v159 = vunpack.c.l.b16 %v102
    %v160 = vunpack.c.h.b16 %v102
    %v161 = vunpack.c.l.b16 %v103
    %v162 = vunpack.c.h.b16 %v103
    %v163 = vunpack.c.l.b16 %v104
    %v164 = vunpack.c.h.b16 %v104
    %v165 = vpack.c.b16 %v135, %v133
    %v166 = vpack.c.b16 %v136, %v134
    %v167 = vpack.c.b16 %v139, %v137
    %v168 = vpack.c.b16 %v140, %v138
    %v169 = vpack.c.b16 %v143, %v141
    %v170 = vpack.c.b16 %v144, %v142
    %v171 = vpack.c.b16 %v147, %v145
    %v172 = vpack.c.b16 %v148, %v146
    %v173 = vpack.c.b16 %v151, %v149
    %v174 = vpack.c.b16 %v152, %v150
    %v175 = vpack.c.b16 %v155, %v153
    %v176 = vpack.c.b16 %v156, %v154
    %v177 = vpack.c.b16 %v159, %v157
    %v178 = vpack.c.b16 %v160, %v158
    %v179 = vpack.c.b16 %v163, %v161
    %v180 = vpack.c.b16 %v164, %v162
    %197 = vmatprep.subr.bf16.mxu0 %v166
    %198 = vmatpush1.bf16.msra.mxu0 %v165
    %199 = vmatprep.subr.bf16.mxu0 %v168
    %200 = vmatpush1.bf16.msra.mxu0 %v167
    %201 = vmatprep.subr.bf16.mxu0 %v170
    %202 = vmatpush1.bf16.msra.mxu0 %v169
    %203 = vmatprep.subr.bf16.mxu0 %v172
    %204 = vmatpush1.bf16.msra.mxu0 %v171
    %205 = vmatprep.subr.bf16.mxu0 %v174
    %206 = vmatpush1.bf16.msra.mxu0 %v173
    %207 = vmatprep.subr.bf16.mxu0 %v176
    %208 = vmatpush1.bf16.msra.mxu0 %v175
    %209 = vmatprep.subr.bf16.mxu0 %v178
    %210 = vmatpush1.bf16.msra.mxu0 %v177
    %211 = vmatprep.subr.bf16.mxu0 %v180
    %212 = vmatpush1.bf16.msra.mxu0 %v179
    %213 = vmatprep.subr.bf16.mxu0 0
    %214 = vmatpush1.bf16.msra.mxu0 0
    %215 = vmatprep.subr.bf16.mxu0 0
    %216 = vmatpush1.bf16.msra.mxu0 0
    %217 = vmatprep.subr.bf16.mxu0 0
    %218 = vmatpush1.bf16.msra.mxu0 0
    %219 = vmatprep.subr.bf16.mxu0 0
    %220 = vmatpush1.bf16.msra.mxu0 0
    %221 = vmatprep.subr.bf16.mxu0 0
    %222 = vmatpush1.bf16.msra.mxu0 0
    %223 = vmatprep.subr.bf16.mxu0 0
    %224 = vmatpush1.bf16.msra.mxu0 0
    %225 = vmatprep.subr.bf16.mxu0 0
    %226 = vmatpush1.bf16.msra.mxu0 0
    %227 = vmatprep.subr.bf16.mxu0 0
    %228 = vmatpush1.bf16.msra.mxu0 0
    %229 = vmatprep.mubr.bf16.mxu0 0
    %230 = vmatmul.mubr.bf16.gmra.mrb[0].mxu0 %v88
    %v231 = vpop.f32.mrb[0].mxu0
    %v232 = vadd.f32 %v110, %v231
    %v233 = vpop.f32.mrb[0].mxu0
    %v234 = vadd.f32 %v114, %v233
    %v235 = vpop.f32.mrb[0].mxu0
    %v236 = vpop.f32.mrb[0].mxu0
    %237 = vdwg.mxu0
    %v238 = vmax.f32 %v232, 0.0
    %v239 = vmax.f32 %v234, 0.0
    %v240 = vpack.c.bf16 %v238, %v238
    %v241 = vpack.c.bf16 %v239, %v239
    %v242 = vld [vmem:[#allocation4] sm:$0xff]
    %v243 = vld [vmem:[#allocation4 + $0x8] sm:$0xff]
    %v244 = vld [vmem:[#allocation4 + $0x10] sm:$0xff]
    %v245 = vld [vmem:[#allocation4 + $0x18] sm:$0xff]
    %v246 = vld [vmem:[#allocation4 + $0x20] sm:$0xff]
    %v247 = vld [vmem:[#allocation4 + $0x28] sm:$0xff]
    %v248 = vld [vmem:[#allocation4 + $0x30] sm:$0xff]
    %v249 = vld [vmem:[#allocation4 + $0x38] sm:$0xff]
    %v250 = vld [vmem:[#allocation4 + $0x40] sm:$0xff]
    %v251 = vld [vmem:[#allocation4 + $0x48] sm:$0xff]
    %v252 = vld [vmem:[#allocation4 + $0x50] sm:$0xff]
    %v253 = vld [vmem:[#allocation4 + $0x58] sm:$0xff]
    %v254 = vld [vmem:[#allocation4 + $0x60] sm:$0xff]
    %v255 = vld [vmem:[#allocation4 + $0x68] sm:$0xff]
    %v256 = vld [vmem:[#allocation4 + $0x70] sm:$0xff]
    %v257 = vld [vmem:[#allocation4 + $0x78] sm:$0xff]
    %v258 = vld [vmem:[#allocation4 + $0x80] sm:$0xff]
    %v259 = vld [vmem:[#allocation4 + $0x88] sm:$0xff]
    %v260 = vld [vmem:[#allocation4 + $0x90] sm:$0xff]
    %v261 = vld [vmem:[#allocation4 + $0x98] sm:$0xff]
    %v262 = vld [vmem:[#allocation4 + $0xa0] sm:$0xff]
    %v263 = vld [vmem:[#allocation4 + $0xa8] sm:$0xff]
    %v264 = vld [vmem:[#allocation4 + $0xb0] sm:$0xff]
    %v265 = vld [vmem:[#allocation4 + $0xb8] sm:$0xff]
    %v266 = vld [vmem:[#allocation4 + $0xc0] sm:$0xff]
    %v267 = vld [vmem:[#allocation4 + $0xc8] sm:$0xff]
    %v268 = vld [vmem:[#allocation4 + $0xd0] sm:$0xff]
    %v269 = vld [vmem:[#allocation4 + $0xd8] sm:$0xff]
    %v270 = vld [vmem:[#allocation4 + $0xe0] sm:$0xff]
    %v271 = vld [vmem:[#allocation4 + $0xe8] sm:$0xff]
    %v272 = vld [vmem:[#allocation4 + $0xf0] sm:$0xff]
    %v273 = vld [vmem:[#allocation4 + $0xf8] sm:$0xff]
    %v274 = vld [vmem:[#allocation4 + $0x100] sm:$0xff]
    %v275 = vld [vmem:[#allocation4 + $0x108] sm:$0xff]
    %v276 = vld [vmem:[#allocation4 + $0x110] sm:$0xff]
    %v277 = vld [vmem:[#allocation4 + $0x118] sm:$0xff]
    %v278 = vld [vmem:[#allocation4 + $0x120] sm:$0xff]
    %v279 = vld [vmem:[#allocation4 + $0x128] sm:$0xff]
    %v280 = vld [vmem:[#allocation4 + $0x130] sm:$0xff]
    %v281 = vld [vmem:[#allocation4 + $0x138] sm:$0xff]
    %v282 = vld [vmem:[#allocation4 + $0x140] sm:$0xff]
    %v283 = vld [vmem:[#allocation4 + $0x148] sm:$0xff]
    %v284 = vld [vmem:[#allocation4 + $0x150] sm:$0xff]
    %v285 = vld [vmem:[#allocation4 + $0x158] sm:$0xff]
    %v286 = vld [vmem:[#allocation4 + $0x160] sm:$0xff]
    %v287 = vld [vmem:[#allocation4 + $0x168] sm:$0xff]
    %v288 = vld [vmem:[#allocation4 + $0x170] sm:$0xff]
    %v289 = vld [vmem:[#allocation4 + $0x178] sm:$0xff]
    %v290 = vld [vmem:[#allocation4 + $0x180] sm:$0xff]
    %v291 = vld [vmem:[#allocation4 + $0x188] sm:$0xff]
    %v292 = vld [vmem:[#allocation4 + $0x190] sm:$0xff]
    %v293 = vld [vmem:[#allocation4 + $0x198] sm:$0xff]
    %v294 = vld [vmem:[#allocation4 + $0x1a0] sm:$0xff]
    %v295 = vld [vmem:[#allocation4 + $0x1a8] sm:$0xff]
    %v296 = vld [vmem:[#allocation4 + $0x1b0] sm:$0xff]
    %v297 = vld [vmem:[#allocation4 + $0x1b8] sm:$0xff]
    %v298 = vld [vmem:[#allocation4 + $0x1c0] sm:$0xff]
    %v299 = vld [vmem:[#allocation4 + $0x1c8] sm:$0xff]
    %v300 = vld [vmem:[#allocation4 + $0x1d0] sm:$0xff]
    %v301 = vld [vmem:[#allocation4 + $0x1d8] sm:$0xff]
    %v302 = vld [vmem:[#allocation4 + $0x1e0] sm:$0xff]
    %v303 = vld [vmem:[#allocation4 + $0x1e8] sm:$0xff]
    %v304 = vld [vmem:[#allocation4 + $0x1f0] sm:$0xff]
    %v305 = vld [vmem:[#allocation4 + $0x1f8] sm:$0xff]
    %v306 = vld [vmem:[%s4] sm:$0xf]
    %v308 = vlaneseq
    %v309 = vshrl.u32 %v308, 7
    %v310 = vsub.s32 0, %v309
    %v311 = vrot.slane %v306, %v310
    %v312 = vlaneseq
    %v313 = vshrl.u32 %v312, 7
    %v314 = vsub.s32 1, %v313
    %v315 = vrot.slane %v306, %v314
    %v316 = vlaneseq
    %v317 = vshrl.u32 %v316, 7
    %v318 = vsub.s32 2, %v317
    %v319 = vrot.slane %v306, %v318
    %v320 = vlaneseq
    %v321 = vshrl.u32 %v320, 7
    %v322 = vsub.s32 3, %v321
    %v323 = vrot.slane %v306, %v322
    %v392 = vunpack.c.l.b16 %v242
    %v393 = vunpack.c.h.b16 %v242
    %v394 = vunpack.c.l.b16 %v243
    %v395 = vunpack.c.h.b16 %v243
    %v396 = vunpack.c.l.b16 %v244
    %v397 = vunpack.c.h.b16 %v244
    %v398 = vunpack.c.l.b16 %v245
    %v399 = vunpack.c.h.b16 %v245
    %v400 = vunpack.c.l.b16 %v246
    %v401 = vunpack.c.h.b16 %v246
    %v402 = vunpack.c.l.b16 %v247
    %v403 = vunpack.c.h.b16 %v247
    %v404 = vunpack.c.l.b16 %v248
    %v405 = vunpack.c.h.b16 %v248
    %v406 = vunpack.c.l.b16 %v249
    %v407 = vunpack.c.h.b16 %v249
    %v408 = vunpack.c.l.b16 %v250
    %v409 = vunpack.c.h.b16 %v250
    %v410 = vunpack.c.l.b16 %v251
    %v411 = vunpack.c.h.b16 %v251
    %v412 = vunpack.c.l.b16 %v252
    %v413 = vunpack.c.h.b16 %v252
    %v414 = vunpack.c.l.b16 %v253
    %v415 = vunpack.c.h.b16 %v253
    %v416 = vunpack.c.l.b16 %v254
    %v417 = vunpack.c.h.b16 %v254
    %v418 = vunpack.c.l.b16 %v255
    %v419 = vunpack.c.h.b16 %v255
    %v420 = vunpack.c.l.b16 %v256
    %v421 = vunpack.c.h.b16 %v256
    %v422 = vunpack.c.l.b16 %v257
    %v423 = vunpack.c.h.b16 %v257
    %v424 = vunpack.c.l.b16 %v258
    %v425 = vunpack.c.h.b16 %v258
    %v426 = vunpack.c.l.b16 %v259
    %v427 = vunpack.c.h.b16 %v259
    %v428 = vunpack.c.l.b16 %v260
    %v429 = vunpack.c.h.b16 %v260
    %v430 = vunpack.c.l.b16 %v261
    %v431 = vunpack.c.h.b16 %v261
    %v432 = vunpack.c.l.b16 %v262
    %v433 = vunpack.c.h.b16 %v262
    %v434 = vunpack.c.l.b16 %v263
    %v435 = vunpack.c.h.b16 %v263
    %v436 = vunpack.c.l.b16 %v264
    %v437 = vunpack.c.h.b16 %v264
    %v438 = vunpack.c.l.b16 %v265
    %v439 = vunpack.c.h.b16 %v265
    %v440 = vunpack.c.l.b16 %v266
    %v441 = vunpack.c.h.b16 %v266
    %v442 = vunpack.c.l.b16 %v267
    %v443 = vunpack.c.h.b16 %v267
    %v444 = vunpack.c.l.b16 %v268
    %v445 = vunpack.c.h.b16 %v268
    %v446 = vunpack.c.l.b16 %v269
    %v447 = vunpack.c.h.b16 %v269
    %v448 = vunpack.c.l.b16 %v270
    %v449 = vunpack.c.h.b16 %v270
    %v450 = vunpack.c.l.b16 %v271
    %v451 = vunpack.c.h.b16 %v271
    %v452 = vunpack.c.l.b16 %v272
    %v453 = vunpack.c.h.b16 %v272
    %v454 = vunpack.c.l.b16 %v273
    %v455 = vunpack.c.h.b16 %v273
    %v456 = vunpack.c.l.b16 %v274
    %v457 = vunpack.c.h.b16 %v274
    %v458 = vunpack.c.l.b16 %v275
    %v459 = vunpack.c.h.b16 %v275
    %v460 = vunpack.c.l.b16 %v276
    %v461 = vunpack.c.h.b16 %v276
    %v462 = vunpack.c.l.b16 %v277
    %v463 = vunpack.c.h.b16 %v277
    %v464 = vunpack.c.l.b16 %v278
    %v465 = vunpack.c.h.b16 %v278
    %v466 = vunpack.c.l.b16 %v279
    %v467 = vunpack.c.h.b16 %v279
    %v468 = vunpack.c.l.b16 %v280
    %v469 = vunpack.c.h.b16 %v280
    %v470 = vunpack.c.l.b16 %v281
    %v471 = vunpack.c.h.b16 %v281
    %v472 = vunpack.c.l.b16 %v282
    %v473 = vunpack.c.h.b16 %v282
    %v474 = vunpack.c.l.b16 %v283
    %v475 = vunpack.c.h.b16 %v283
    %v476 = vunpack.c.l.b16 %v284
    %v477 = vunpack.c.h.b16 %v284
    %v478 = vunpack.c.l.b16 %v285
    %v479 = vunpack.c.h.b16 %v285
    %v480 = vunpack.c.l.b16 %v286
    %v481 = vunpack.c.h.b16 %v286
    %v482 = vunpack.c.l.b16 %v287
    %v483 = vunpack.c.h.b16 %v287
    %v484 = vunpack.c.l.b16 %v288
    %v485 = vunpack.c.h.b16 %v288
    %v486 = vunpack.c.l.b16 %v289
    %v487 = vunpack.c.h.b16 %v289
    %v488 = vunpack.c.l.b16 %v290
    %v489 = vunpack.c.h.b16 %v290
    %v490 = vunpack.c.l.b16 %v291
    %v491 = vunpack.c.h.b16 %v291
    %v492 = vunpack.c.l.b16 %v292
    %v493 = vunpack.c.h.b16 %v292
    %v494 = vunpack.c.l.b16 %v293
    %v495 = vunpack.c.h.b16 %v293
    %v496 = vunpack.c.l.b16 %v294
    %v497 = vunpack.c.h.b16 %v294
    %v498 = vunpack.c.l.b16 %v295
    %v499 = vunpack.c.h.b16 %v295
    %v500 = vunpack.c.l.b16 %v296
    %v501 = vunpack.c.h.b16 %v296
    %v502 = vunpack.c.l.b16 %v297
    %v503 = vunpack.c.h.b16 %v297
    %v504 = vunpack.c.l.b16 %v298
    %v505 = vunpack.c.h.b16 %v298
    %v506 = vunpack.c.l.b16 %v299
    %v507 = vunpack.c.h.b16 %v299
    %v508 = vunpack.c.l.b16 %v300
    %v509 = vunpack.c.h.b16 %v300
    %v510 = vunpack.c.l.b16 %v301
    %v511 = vunpack.c.h.b16 %v301
    %v512 = vunpack.c.l.b16 %v302
    %v513 = vunpack.c.h.b16 %v302
    %v514 = vunpack.c.l.b16 %v303
    %v515 = vunpack.c.h.b16 %v303
    %v516 = vunpack.c.l.b16 %v304
    %v517 = vunpack.c.h.b16 %v304
    %v518 = vunpack.c.l.b16 %v305
    %v519 = vunpack.c.h.b16 %v305
    %v520 = vpack.c.b16 %v396, %v392
    %v521 = vpack.c.b16 %v397, %v393
    %v522 = vpack.c.b16 %v398, %v394
    %v523 = vpack.c.b16 %v399, %v395
    %v524 = vpack.c.b16 %v404, %v400
    %v525 = vpack.c.b16 %v405, %v401
    %v526 = vpack.c.b16 %v406, %v402
    %v527 = vpack.c.b16 %v407, %v403
    %v528 = vpack.c.b16 %v412, %v408
    %v529 = vpack.c.b16 %v413, %v409
    %v530 = vpack.c.b16 %v414, %v410
    %v531 = vpack.c.b16 %v415, %v411
    %v532 = vpack.c.b16 %v420, %v416
    %v533 = vpack.c.b16 %v421, %v417
    %v534 = vpack.c.b16 %v422, %v418
    %v535 = vpack.c.b16 %v423, %v419
    %v536 = vpack.c.b16 %v428, %v424
    %v537 = vpack.c.b16 %v429, %v425
    %v538 = vpack.c.b16 %v430, %v426
    %v539 = vpack.c.b16 %v431, %v427
    %v540 = vpack.c.b16 %v436, %v432
    %v541 = vpack.c.b16 %v437, %v433
    %v542 = vpack.c.b16 %v438, %v434
    %v543 = vpack.c.b16 %v439, %v435
    %v544 = vpack.c.b16 %v444, %v440
    %v545 = vpack.c.b16 %v445, %v441
    %v546 = vpack.c.b16 %v446, %v442
    %v547 = vpack.c.b16 %v447, %v443
    %v548 = vpack.c.b16 %v452, %v448
    %v549 = vpack.c.b16 %v453, %v449
    %v550 = vpack.c.b16 %v454, %v450
    %v551 = vpack.c.b16 %v455, %v451
    %v552 = vpack.c.b16 %v460, %v456
    %v553 = vpack.c.b16 %v461, %v457
    %v554 = vpack.c.b16 %v462, %v458
    %v555 = vpack.c.b16 %v463, %v459
    %v556 = vpack.c.b16 %v468, %v464
    %v557 = vpack.c.b16 %v469, %v465
    %v558 = vpack.c.b16 %v470, %v466
    %v559 = vpack.c.b16 %v471, %v467
    %v560 = vpack.c.b16 %v476, %v472
    %v561 = vpack.c.b16 %v477, %v473
    %v562 = vpack.c.b16 %v478, %v474
    %v563 = vpack.c.b16 %v479, %v475
    %v564 = vpack.c.b16 %v484, %v480
    %v565 = vpack.c.b16 %v485, %v481
    %v566 = vpack.c.b16 %v486, %v482
    %v567 = vpack.c.b16 %v487, %v483
    %v568 = vpack.c.b16 %v492, %v488
    %v569 = vpack.c.b16 %v493, %v489
    %v570 = vpack.c.b16 %v494, %v490
    %v571 = vpack.c.b16 %v495, %v491
    %v572 = vpack.c.b16 %v500, %v496
    %v573 = vpack.c.b16 %v501, %v497
    %v574 = vpack.c.b16 %v502, %v498
    %v575 = vpack.c.b16 %v503, %v499
    %v576 = vpack.c.b16 %v508, %v504
    %v577 = vpack.c.b16 %v509, %v505
    %v578 = vpack.c.b16 %v510, %v506
    %v579 = vpack.c.b16 %v511, %v507
    %v580 = vpack.c.b16 %v516, %v512
    %v581 = vpack.c.b16 %v517, %v513
    %v582 = vpack.c.b16 %v518, %v514
    %v583 = vpack.c.b16 %v519, %v515
    %648 = vmatprep.subr.bf16.mxu0 %v521
    %649 = vmatpush1.bf16.msra.mxu0 %v520
    %650 = vmatprep.subr.bf16.mxu0 %v525
    %651 = vmatpush1.bf16.msra.mxu0 %v524
    %652 = vmatprep.subr.bf16.mxu0 %v529
    %653 = vmatpush1.bf16.msra.mxu0 %v528
    %654 = vmatprep.subr.bf16.mxu0 %v533
    %655 = vmatpush1.bf16.msra.mxu0 %v532
    %656 = vmatprep.subr.bf16.mxu0 %v537
    %657 = vmatpush1.bf16.msra.mxu0 %v536
    %658 = vmatprep.subr.bf16.mxu0 %v541
    %659 = vmatpush1.bf16.msra.mxu0 %v540
    %660 = vmatprep.subr.bf16.mxu0 %v545
    %661 = vmatpush1.bf16.msra.mxu0 %v544
    %662 = vmatprep.subr.bf16.mxu0 %v549
    %663 = vmatpush1.bf16.msra.mxu0 %v548
    %664 = vmatprep.subr.bf16.mxu0 %v553
    %665 = vmatpush1.bf16.msra.mxu0 %v552
    %666 = vmatprep.subr.bf16.mxu0 %v557
    %667 = vmatpush1.bf16.msra.mxu0 %v556
    %668 = vmatprep.subr.bf16.mxu0 %v561
    %669 = vmatpush1.bf16.msra.mxu0 %v560
    %670 = vmatprep.subr.bf16.mxu0 %v565
    %671 = vmatpush1.bf16.msra.mxu0 %v564
    %672 = vmatprep.subr.bf16.mxu0 %v569
    %673 = vmatpush1.bf16.msra.mxu0 %v568
    %674 = vmatprep.subr.bf16.mxu0 %v573
    %675 = vmatpush1.bf16.msra.mxu0 %v572
    %676 = vmatprep.subr.bf16.mxu0 %v577
    %677 = vmatpush1.bf16.msra.mxu0 %v576
    %678 = vmatprep.subr.bf16.mxu0 %v581
    %679 = vmatpush1.bf16.msra.mxu0 %v580
    %680 = vmatprep.mubr.bf16.mxu0 %v241
    %681 = vmatmul.mubr.bf16.gmra.mrb[0].mxu0 %v240
    %v682 = vpop.f32.mrb[0].mxu0
    %v683 = vadd.f32 %v311, %v682
    %v684 = vpop.f32.mrb[0].mxu0
    %v685 = vadd.f32 %v315, %v684
    %v686 = vpop.f32.mrb[0].mxu0
    %v687 = vpop.f32.mrb[0].mxu0
    %688 = vdwg.mxu0
    %689 = vmatprep.subr.bf16.mxu0 %v523
    %690 = vmatpush1.bf16.msra.mxu0 %v522
    %691 = vmatprep.subr.bf16.mxu0 %v527
    %692 = vmatpush1.bf16.msra.mxu0 %v526
    %693 = vmatprep.subr.bf16.mxu0 %v531
    %694 = vmatpush1.bf16.msra.mxu0 %v530
    %695 = vmatprep.subr.bf16.mxu0 %v535
    %696 = vmatpush1.bf16.msra.mxu0 %v534
    %697 = vmatprep.subr.bf16.mxu0 %v539
    %698 = vmatpush1.bf16.msra.mxu0 %v538
    %699 = vmatprep.subr.bf16.mxu0 %v543
    %700 = vmatpush1.bf16.msra.mxu0 %v542
    %701 = vmatprep.subr.bf16.mxu0 %v547
    %702 = vmatpush1.bf16.msra.mxu0 %v546
    %703 = vmatprep.subr.bf16.mxu0 %v551
    %704 = vmatpush1.bf16.msra.mxu0 %v550
    %705 = vmatprep.subr.bf16.mxu0 %v555
    %706 = vmatpush1.bf16.msra.mxu0 %v554
    %707 = vmatprep.subr.bf16.mxu0 %v559
    %708 = vmatpush1.bf16.msra.mxu0 %v558
    %709 = vmatprep.subr.bf16.mxu0 %v563
    %710 = vmatpush1.bf16.msra.mxu0 %v562
    %711 = vmatprep.subr.bf16.mxu0 %v567
    %712 = vmatpush1.bf16.msra.mxu0 %v566
    %713 = vmatprep.subr.bf16.mxu0 %v571
    %714 = vmatpush1.bf16.msra.mxu0 %v570
    %715 = vmatprep.subr.bf16.mxu0 %v575
    %716 = vmatpush1.bf16.msra.mxu0 %v574
    %717 = vmatprep.subr.bf16.mxu0 %v579
    %718 = vmatpush1.bf16.msra.mxu0 %v578
    %719 = vmatprep.subr.bf16.mxu0 %v583
    %720 = vmatpush1.bf16.msra.mxu0 %v582
    %721 = vmatprep.mubr.bf16.mxu0 %v241
    %722 = vmatmul.mubr.bf16.gmra.mrb[0].mxu0 %v240
    %v723 = vpop.f32.mrb[0].mxu0
    %v724 = vadd.f32 %v319, %v723
    %v725 = vpop.f32.mrb[0].mxu0
    %v726 = vadd.f32 %v323, %v725
    %v727 = vpop.f32.mrb[0].mxu0
    %v728 = vpop.f32.mrb[0].mxu0
    %729 = vdwg.mxu0
    %v730 = vmax.f32 %v683, 0.0
    %v731 = vmax.f32 %v685, 0.0
    %v732 = vmax.f32 %v724, 0.0
    %v733 = vmax.f32 %v726, 0.0
    %v734 = vpack.c.bf16 %v730, %v730
    %v735 = vpack.c.bf16 %v731, %v731
    %v736 = vpack.c.bf16 %v732, %v732
    %v737 = vpack.c.bf16 %v733, %v733
    %v738 = vld [vmem:[#allocation6] sm:$0xff]
    %v739 = vld [vmem:[#allocation6 + $0x8] sm:$0xff]
    %v740 = vld [vmem:[#allocation6 + $0x10] sm:$0xff]
    %v741 = vld [vmem:[#allocation6 + $0x18] sm:$0xff]
    %v742 = vld [vmem:[#allocation6 + $0x20] sm:$0xff]
    %v743 = vld [vmem:[#allocation6 + $0x28] sm:$0xff]
    %v744 = vld [vmem:[#allocation6 + $0x30] sm:$0xff]
    %v745 = vld [vmem:[#allocation6 + $0x38] sm:$0xff]
    %v746 = vld [vmem:[#allocation6 + $0x40] sm:$0xff]
    %v747 = vld [vmem:[#allocation6 + $0x48] sm:$0xff]
    %v748 = vld [vmem:[#allocation6 + $0x50] sm:$0xff]
    %v749 = vld [vmem:[#allocation6 + $0x58] sm:$0xff]
    %v750 = vld [vmem:[#allocation6 + $0x60] sm:$0xff]
    %v751 = vld [vmem:[#allocation6 + $0x68] sm:$0xff]
    %v752 = vld [vmem:[#allocation6 + $0x70] sm:$0xff]
    %v753 = vld [vmem:[#allocation6 + $0x78] sm:$0xff]
    %v754 = vld [vmem:[#allocation6 + $0x80] sm:$0xff]
    %v755 = vld [vmem:[#allocation6 + $0x88] sm:$0xff]
    %v756 = vld [vmem:[#allocation6 + $0x90] sm:$0xff]
    %v757 = vld [vmem:[#allocation6 + $0x98] sm:$0xff]
    %v758 = vld [vmem:[#allocation6 + $0xa0] sm:$0xff]
    %v759 = vld [vmem:[#allocation6 + $0xa8] sm:$0xff]
    %v760 = vld [vmem:[#allocation6 + $0xb0] sm:$0xff]
    %v761 = vld [vmem:[#allocation6 + $0xb8] sm:$0xff]
    %v762 = vld [vmem:[#allocation6 + $0xc0] sm:$0xff]
    %v763 = vld [vmem:[#allocation6 + $0xc8] sm:$0xff]
    %v764 = vld [vmem:[#allocation6 + $0xd0] sm:$0xff]
    %v765 = vld [vmem:[#allocation6 + $0xd8] sm:$0xff]
    %v766 = vld [vmem:[#allocation6 + $0xe0] sm:$0xff]
    %v767 = vld [vmem:[#allocation6 + $0xe8] sm:$0xff]
    %v768 = vld [vmem:[#allocation6 + $0xf0] sm:$0xff]
    %v769 = vld [vmem:[#allocation6 + $0xf8] sm:$0xff]
    %v770 = vld [vmem:[#allocation6 + $0x100] sm:$0xff]
    %v771 = vld [vmem:[#allocation6 + $0x108] sm:$0xff]
    %v772 = vld [vmem:[#allocation6 + $0x110] sm:$0xff]
    %v773 = vld [vmem:[#allocation6 + $0x118] sm:$0xff]
    %v774 = vld [vmem:[#allocation6 + $0x120] sm:$0xff]
    %v775 = vld [vmem:[#allocation6 + $0x128] sm:$0xff]
    %v776 = vld [vmem:[#allocation6 + $0x130] sm:$0xff]
    %v777 = vld [vmem:[#allocation6 + $0x138] sm:$0xff]
    %v778 = vld [vmem:[#allocation6 + $0x140] sm:$0xff]
    %v779 = vld [vmem:[#allocation6 + $0x148] sm:$0xff]
    %v780 = vld [vmem:[#allocation6 + $0x150] sm:$0xff]
    %v781 = vld [vmem:[#allocation6 + $0x158] sm:$0xff]
    %v782 = vld [vmem:[#allocation6 + $0x160] sm:$0xff]
    %v783 = vld [vmem:[#allocation6 + $0x168] sm:$0xff]
    %v784 = vld [vmem:[#allocation6 + $0x170] sm:$0xff]
    %v785 = vld [vmem:[#allocation6 + $0x178] sm:$0xff]
    %v786 = vld [vmem:[#allocation6 + $0x180] sm:$0xff]
    %v787 = vld [vmem:[#allocation6 + $0x188] sm:$0xff]
    %v788 = vld [vmem:[#allocation6 + $0x190] sm:$0xff]
    %v789 = vld [vmem:[#allocation6 + $0x198] sm:$0xff]
    %v790 = vld [vmem:[#allocation6 + $0x1a0] sm:$0xff]
    %v791 = vld [vmem:[#allocation6 + $0x1a8] sm:$0xff]
    %v792 = vld [vmem:[#allocation6 + $0x1b0] sm:$0xff]
    %v793 = vld [vmem:[#allocation6 + $0x1b8] sm:$0xff]
    %v794 = vld [vmem:[#allocation6 + $0x1c0] sm:$0xff]
    %v795 = vld [vmem:[#allocation6 + $0x1c8] sm:$0xff]
    %v796 = vld [vmem:[#allocation6 + $0x1d0] sm:$0xff]
    %v797 = vld [vmem:[#allocation6 + $0x1d8] sm:$0xff]
    %v798 = vld [vmem:[#allocation6 + $0x1e0] sm:$0xff]
    %v799 = vld [vmem:[#allocation6 + $0x1e8] sm:$0xff]
    %v800 = vld [vmem:[#allocation6 + $0x1f0] sm:$0xff]
    %v801 = vld [vmem:[#allocation6 + $0x1f8] sm:$0xff]
    %v802 = vld [vmem:[#allocation6 + $0x200] sm:$0xff]
    %v803 = vld [vmem:[#allocation6 + $0x208] sm:$0xff]
    %v804 = vld [vmem:[#allocation6 + $0x210] sm:$0xff]
    %v805 = vld [vmem:[#allocation6 + $0x218] sm:$0xff]
    %v806 = vld [vmem:[#allocation6 + $0x220] sm:$0xff]
    %v807 = vld [vmem:[#allocation6 + $0x228] sm:$0xff]
    %v808 = vld [vmem:[#allocation6 + $0x230] sm:$0xff]
    %v809 = vld [vmem:[#allocation6 + $0x238] sm:$0xff]
    %v810 = vld [vmem:[#allocation6 + $0x240] sm:$0xff]
    %v811 = vld [vmem:[#allocation6 + $0x248] sm:$0xff]
    %v812 = vld [vmem:[#allocation6 + $0x250] sm:$0xff]
    %v813 = vld [vmem:[#allocation6 + $0x258] sm:$0xff]
    %v814 = vld [vmem:[#allocation6 + $0x260] sm:$0xff]
    %v815 = vld [vmem:[#allocation6 + $0x268] sm:$0xff]
    %v816 = vld [vmem:[#allocation6 + $0x270] sm:$0xff]
    %v817 = vld [vmem:[#allocation6 + $0x278] sm:$0xff]
    %v818 = vld [vmem:[#allocation6 + $0x280] sm:$0xff]
    %v819 = vld [vmem:[#allocation6 + $0x288] sm:$0xff]
    %v820 = vld [vmem:[#allocation6 + $0x290] sm:$0xff]
    %v821 = vld [vmem:[#allocation6 + $0x298] sm:$0xff]
    %v822 = vld [vmem:[#allocation6 + $0x2a0] sm:$0xff]
    %v823 = vld [vmem:[#allocation6 + $0x2a8] sm:$0xff]
    %v824 = vld [vmem:[#allocation6 + $0x2b0] sm:$0xff]
    %v825 = vld [vmem:[#allocation6 + $0x2b8] sm:$0xff]
    %v826 = vld [vmem:[#allocation6 + $0x2c0] sm:$0xff]
    %v827 = vld [vmem:[#allocation6 + $0x2c8] sm:$0xff]
    %v828 = vld [vmem:[#allocation6 + $0x2d0] sm:$0xff]
    %v829 = vld [vmem:[#allocation6 + $0x2d8] sm:$0xff]
    %v830 = vld [vmem:[#allocation6 + $0x2e0] sm:$0xff]
    %v831 = vld [vmem:[#allocation6 + $0x2e8] sm:$0xff]
    %v832 = vld [vmem:[#allocation6 + $0x2f0] sm:$0xff]
    %v833 = vld [vmem:[#allocation6 + $0x2f8] sm:$0xff]
    %v834 = vld [vmem:[#allocation6 + $0x300] sm:$0xff]
    %v835 = vld [vmem:[#allocation6 + $0x308] sm:$0xff]
    %v836 = vld [vmem:[#allocation6 + $0x310] sm:$0xff]
    %v837 = vld [vmem:[#allocation6 + $0x318] sm:$0xff]
    %v838 = vld [vmem:[#allocation6 + $0x320] sm:$0xff]
    %v839 = vld [vmem:[#allocation6 + $0x328] sm:$0xff]
    %v840 = vld [vmem:[#allocation6 + $0x330] sm:$0xff]
    %v841 = vld [vmem:[#allocation6 + $0x338] sm:$0xff]
    %v842 = vld [vmem:[#allocation6 + $0x340] sm:$0xff]
    %v843 = vld [vmem:[#allocation6 + $0x348] sm:$0xff]
    %v844 = vld [vmem:[#allocation6 + $0x350] sm:$0xff]
    %v845 = vld [vmem:[#allocation6 + $0x358] sm:$0xff]
    %v846 = vld [vmem:[#allocation6 + $0x360] sm:$0xff]
    %v847 = vld [vmem:[#allocation6 + $0x368] sm:$0xff]
    %v848 = vld [vmem:[#allocation6 + $0x370] sm:$0xff]
    %v849 = vld [vmem:[#allocation6 + $0x378] sm:$0xff]
    %v850 = vld [vmem:[#allocation6 + $0x380] sm:$0xff]
    %v851 = vld [vmem:[#allocation6 + $0x388] sm:$0xff]
    %v852 = vld [vmem:[#allocation6 + $0x390] sm:$0xff]
    %v853 = vld [vmem:[#allocation6 + $0x398] sm:$0xff]
    %v854 = vld [vmem:[#allocation6 + $0x3a0] sm:$0xff]
    %v855 = vld [vmem:[#allocation6 + $0x3a8] sm:$0xff]
    %v856 = vld [vmem:[#allocation6 + $0x3b0] sm:$0xff]
    %v857 = vld [vmem:[#allocation6 + $0x3b8] sm:$0xff]
    %v858 = vld [vmem:[#allocation6 + $0x3c0] sm:$0xff]
    %v859 = vld [vmem:[#allocation6 + $0x3c8] sm:$0xff]
    %v860 = vld [vmem:[#allocation6 + $0x3d0] sm:$0xff]
    %v861 = vld [vmem:[#allocation6 + $0x3d8] sm:$0xff]
    %v862 = vld [vmem:[#allocation6 + $0x3e0] sm:$0xff]
    %v863 = vld [vmem:[#allocation6 + $0x3e8] sm:$0xff]
    %v864 = vld [vmem:[#allocation6 + $0x3f0] sm:$0xff]
    %v865 = vld [vmem:[#allocation6 + $0x3f8] sm:$0xff]
    %v866 = vld [vmem:[#allocation6 + $0x400] sm:$0xff]
    %v867 = vld [vmem:[#allocation6 + $0x408] sm:$0xff]
    %v868 = vld [vmem:[#allocation6 + $0x410] sm:$0xff]
    %v869 = vld [vmem:[#allocation6 + $0x418] sm:$0xff]
    %v870 = vld [vmem:[#allocation6 + $0x420] sm:$0xff]
    %v871 = vld [vmem:[#allocation6 + $0x428] sm:$0xff]
    %v872 = vld [vmem:[#allocation6 + $0x430] sm:$0xff]
    %v873 = vld [vmem:[#allocation6 + $0x438] sm:$0xff]
    %v874 = vld [vmem:[#allocation6 + $0x440] sm:$0xff]
    %v875 = vld [vmem:[#allocation6 + $0x448] sm:$0xff]
    %v876 = vld [vmem:[#allocation6 + $0x450] sm:$0xff]
    %v877 = vld [vmem:[#allocation6 + $0x458] sm:$0xff]
    %v878 = vld [vmem:[#allocation6 + $0x460] sm:$0xff]
    %v879 = vld [vmem:[#allocation6 + $0x468] sm:$0xff]
    %v880 = vld [vmem:[#allocation6 + $0x470] sm:$0xff]
    %v881 = vld [vmem:[#allocation6 + $0x478] sm:$0xff]
    %v882 = vld [vmem:[#allocation6 + $0x480] sm:$0xff]
    %v883 = vld [vmem:[#allocation6 + $0x488] sm:$0xff]
    %v884 = vld [vmem:[#allocation6 + $0x490] sm:$0xff]
    %v885 = vld [vmem:[#allocation6 + $0x498] sm:$0xff]
    %v886 = vld [vmem:[#allocation6 + $0x4a0] sm:$0xff]
    %v887 = vld [vmem:[#allocation6 + $0x4a8] sm:$0xff]
    %v888 = vld [vmem:[#allocation6 + $0x4b0] sm:$0xff]
    %v889 = vld [vmem:[#allocation6 + $0x4b8] sm:$0xff]
    %v890 = vld [vmem:[#allocation6 + $0x4c0] sm:$0xff]
    %v891 = vld [vmem:[#allocation6 + $0x4c8] sm:$0xff]
    %v892 = vld [vmem:[#allocation6 + $0x4d0] sm:$0xff]
    %v893 = vld [vmem:[#allocation6 + $0x4d8] sm:$0xff]
    %v894 = vld [vmem:[#allocation6 + $0x4e0] sm:$0xff]
    %v895 = vld [vmem:[#allocation6 + $0x4e8] sm:$0xff]
    %v896 = vld [vmem:[#allocation6 + $0x4f0] sm:$0xff]
    %v897 = vld [vmem:[#allocation6 + $0x4f8] sm:$0xff]
    %v898 = vld [vmem:[#allocation6 + $0x500] sm:$0xff]
    %v899 = vld [vmem:[#allocation6 + $0x508] sm:$0xff]
    %v900 = vld [vmem:[#allocation6 + $0x510] sm:$0xff]
    %v901 = vld [vmem:[#allocation6 + $0x518] sm:$0xff]
    %v902 = vld [vmem:[#allocation6 + $0x520] sm:$0xff]
    %v903 = vld [vmem:[#allocation6 + $0x528] sm:$0xff]
    %v904 = vld [vmem:[#allocation6 + $0x530] sm:$0xff]
    %v905 = vld [vmem:[#allocation6 + $0x538] sm:$0xff]
    %v906 = vld [vmem:[#allocation6 + $0x540] sm:$0xff]
    %v907 = vld [vmem:[#allocation6 + $0x548] sm:$0xff]
    %v908 = vld [vmem:[#allocation6 + $0x550] sm:$0xff]
    %v909 = vld [vmem:[#allocation6 + $0x558] sm:$0xff]
    %v910 = vld [vmem:[#allocation6 + $0x560] sm:$0xff]
    %v911 = vld [vmem:[#allocation6 + $0x568] sm:$0xff]
    %v912 = vld [vmem:[#allocation6 + $0x570] sm:$0xff]
    %v913 = vld [vmem:[#allocation6 + $0x578] sm:$0xff]
    %v914 = vld [vmem:[#allocation6 + $0x580] sm:$0xff]
    %v915 = vld [vmem:[#allocation6 + $0x588] sm:$0xff]
    %v916 = vld [vmem:[#allocation6 + $0x590] sm:$0xff]
    %v917 = vld [vmem:[#allocation6 + $0x598] sm:$0xff]
    %v918 = vld [vmem:[#allocation6 + $0x5a0] sm:$0xff]
    %v919 = vld [vmem:[#allocation6 + $0x5a8] sm:$0xff]
    %v920 = vld [vmem:[#allocation6 + $0x5b0] sm:$0xff]
    %v921 = vld [vmem:[#allocation6 + $0x5b8] sm:$0xff]
    %v922 = vld [vmem:[#allocation6 + $0x5c0] sm:$0xff]
    %v923 = vld [vmem:[#allocation6 + $0x5c8] sm:$0xff]
    %v924 = vld [vmem:[#allocation6 + $0x5d0] sm:$0xff]
    %v925 = vld [vmem:[#allocation6 + $0x5d8] sm:$0xff]
    %v926 = vld [vmem:[#allocation6 + $0x5e0] sm:$0xff]
    %v927 = vld [vmem:[#allocation6 + $0x5e8] sm:$0xff]
    %v928 = vld [vmem:[#allocation6 + $0x5f0] sm:$0xff]
    %v929 = vld [vmem:[#allocation6 + $0x5f8] sm:$0xff]
    %v930 = vld [vmem:[#allocation6 + $0x600] sm:$0xff]
    %v931 = vld [vmem:[#allocation6 + $0x608] sm:$0xff]
    %v932 = vld [vmem:[#allocation6 + $0x610] sm:$0xff]
    %v933 = vld [vmem:[#allocation6 + $0x618] sm:$0xff]
    %v934 = vld [vmem:[#allocation6 + $0x620] sm:$0xff]
    %v935 = vld [vmem:[#allocation6 + $0x628] sm:$0xff]
    %v936 = vld [vmem:[#allocation6 + $0x630] sm:$0xff]
    %v937 = vld [vmem:[#allocation6 + $0x638] sm:$0xff]
    %v938 = vld [vmem:[#allocation6 + $0x640] sm:$0xff]
    %v939 = vld [vmem:[#allocation6 + $0x648] sm:$0xff]
    %v940 = vld [vmem:[#allocation6 + $0x650] sm:$0xff]
    %v941 = vld [vmem:[#allocation6 + $0x658] sm:$0xff]
    %v942 = vld [vmem:[#allocation6 + $0x660] sm:$0xff]
    %v943 = vld [vmem:[#allocation6 + $0x668] sm:$0xff]
    %v944 = vld [vmem:[#allocation6 + $0x670] sm:$0xff]
    %v945 = vld [vmem:[#allocation6 + $0x678] sm:$0xff]
    %v946 = vld [vmem:[#allocation6 + $0x680] sm:$0xff]
    %v947 = vld [vmem:[#allocation6 + $0x688] sm:$0xff]
    %v948 = vld [vmem:[#allocation6 + $0x690] sm:$0xff]
    %v949 = vld [vmem:[#allocation6 + $0x698] sm:$0xff]
    %v950 = vld [vmem:[#allocation6 + $0x6a0] sm:$0xff]
    %v951 = vld [vmem:[#allocation6 + $0x6a8] sm:$0xff]
    %v952 = vld [vmem:[#allocation6 + $0x6b0] sm:$0xff]
    %v953 = vld [vmem:[#allocation6 + $0x6b8] sm:$0xff]
    %v954 = vld [vmem:[#allocation6 + $0x6c0] sm:$0xff]
    %v955 = vld [vmem:[#allocation6 + $0x6c8] sm:$0xff]
    %v956 = vld [vmem:[#allocation6 + $0x6d0] sm:$0xff]
    %v957 = vld [vmem:[#allocation6 + $0x6d8] sm:$0xff]
    %v958 = vld [vmem:[#allocation6 + $0x6e0] sm:$0xff]
    %v959 = vld [vmem:[#allocation6 + $0x6e8] sm:$0xff]
    %v960 = vld [vmem:[#allocation6 + $0x6f0] sm:$0xff]
    %v961 = vld [vmem:[#allocation6 + $0x6f8] sm:$0xff]
    %v962 = vld [vmem:[#allocation6 + $0x700] sm:$0xff]
    %v963 = vld [vmem:[#allocation6 + $0x708] sm:$0xff]
    %v964 = vld [vmem:[#allocation6 + $0x710] sm:$0xff]
    %v965 = vld [vmem:[#allocation6 + $0x718] sm:$0xff]
    %v966 = vld [vmem:[#allocation6 + $0x720] sm:$0xff]
    %v967 = vld [vmem:[#allocation6 + $0x728] sm:$0xff]
    %v968 = vld [vmem:[#allocation6 + $0x730] sm:$0xff]
    %v969 = vld [vmem:[#allocation6 + $0x738] sm:$0xff]
    %v970 = vld [vmem:[#allocation6 + $0x740] sm:$0xff]
    %v971 = vld [vmem:[#allocation6 + $0x748] sm:$0xff]
    %v972 = vld [vmem:[#allocation6 + $0x750] sm:$0xff]
    %v973 = vld [vmem:[#allocation6 + $0x758] sm:$0xff]
    %v974 = vld [vmem:[#allocation6 + $0x760] sm:$0xff]
    %v975 = vld [vmem:[#allocation6 + $0x768] sm:$0xff]
    %v976 = vld [vmem:[#allocation6 + $0x770] sm:$0xff]
    %v977 = vld [vmem:[#allocation6 + $0x778] sm:$0xff]
    %v978 = vld [vmem:[#allocation6 + $0x780] sm:$0xff]
    %v979 = vld [vmem:[#allocation6 + $0x788] sm:$0xff]
    %v980 = vld [vmem:[#allocation6 + $0x790] sm:$0xff]
    %v981 = vld [vmem:[#allocation6 + $0x798] sm:$0xff]
    %v982 = vld [vmem:[#allocation6 + $0x7a0] sm:$0xff]
    %v983 = vld [vmem:[#allocation6 + $0x7a8] sm:$0xff]
    %v984 = vld [vmem:[#allocation6 + $0x7b0] sm:$0xff]
    %v985 = vld [vmem:[#allocation6 + $0x7b8] sm:$0xff]
    %v986 = vld [vmem:[#allocation6 + $0x7c0] sm:$0xff]
    %v987 = vld [vmem:[#allocation6 + $0x7c8] sm:$0xff]
    %v988 = vld [vmem:[#allocation6 + $0x7d0] sm:$0xff]
    %v989 = vld [vmem:[#allocation6 + $0x7d8] sm:$0xff]
    %v990 = vld [vmem:[#allocation6 + $0x7e0] sm:$0xff]
    %v991 = vld [vmem:[#allocation6 + $0x7e8] sm:$0xff]
    %v992 = vld [vmem:[#allocation6 + $0x7f0] sm:$0xff]
    %v993 = vld [vmem:[#allocation6 + $0x7f8] sm:$0xff]
    %v994 = vld [vmem:[%s6] sm:$0xff]
    %v996 = vlaneseq
    %v997 = vshrl.u32 %v996, 7
    %v998 = vsub.s32 0, %v997
    %v999 = vrot.slane %v994, %v998
    %v1000 = vlaneseq
    %v1001 = vshrl.u32 %v1000, 7
    %v1002 = vsub.s32 1, %v1001
    %v1003 = vrot.slane %v994, %v1002
    %v1004 = vlaneseq
    %v1005 = vshrl.u32 %v1004, 7
    %v1006 = vsub.s32 2, %v1005
    %v1007 = vrot.slane %v994, %v1006
    %v1008 = vlaneseq
    %v1009 = vshrl.u32 %v1008, 7
    %v1010 = vsub.s32 3, %v1009
    %v1011 = vrot.slane %v994, %v1010
    %v1012 = vlaneseq
    %v1013 = vshrl.u32 %v1012, 7
    %v1014 = vsub.s32 4, %v1013
    %v1015 = vrot.slane %v994, %v1014
    %v1016 = vlaneseq
    %v1017 = vshrl.u32 %v1016, 7
    %v1018 = vsub.s32 5, %v1017
    %v1019 = vrot.slane %v994, %v1018
    %v1020 = vlaneseq
    %v1021 = vshrl.u32 %v1020, 7
    %v1022 = vsub.s32 6, %v1021
    %v1023 = vrot.slane %v994, %v1022
    %v1024 = vlaneseq
    %v1025 = vshrl.u32 %v1024, 7
    %v1026 = vsub.s32 7, %v1025
    %v1027 = vrot.slane %v994, %v1026
    %v1292 = vunpack.c.l.b16 %v738
    %v1293 = vunpack.c.h.b16 %v738
    %v1294 = vunpack.c.l.b16 %v739
    %v1295 = vunpack.c.h.b16 %v739
    %v1296 = vunpack.c.l.b16 %v740
    %v1297 = vunpack.c.h.b16 %v740
    %v1298 = vunpack.c.l.b16 %v741
    %v1299 = vunpack.c.h.b16 %v741
    %v1300 = vunpack.c.l.b16 %v742
    %v1301 = vunpack.c.h.b16 %v742
    %v1302 = vunpack.c.l.b16 %v743
    %v1303 = vunpack.c.h.b16 %v743
    %v1304 = vunpack.c.l.b16 %v744
    %v1305 = vunpack.c.h.b16 %v744
    %v1306 = vunpack.c.l.b16 %v745
    %v1307 = vunpack.c.h.b16 %v745
    %v1308 = vunpack.c.l.b16 %v746
    %v1309 = vunpack.c.h.b16 %v746
    %v1310 = vunpack.c.l.b16 %v747
    %v1311 = vunpack.c.h.b16 %v747
    %v1312 = vunpack.c.l.b16 %v748
    %v1313 = vunpack.c.h.b16 %v748
    %v1314 = vunpack.c.l.b16 %v749
    %v1315 = vunpack.c.h.b16 %v749
    %v1316 = vunpack.c.l.b16 %v750
    %v1317 = vunpack.c.h.b16 %v750
    %v1318 = vunpack.c.l.b16 %v751
    %v1319 = vunpack.c.h.b16 %v751
    %v1320 = vunpack.c.l.b16 %v752
    %v1321 = vunpack.c.h.b16 %v752
    %v1322 = vunpack.c.l.b16 %v753
    %v1323 = vunpack.c.h.b16 %v753
    %v1324 = vunpack.c.l.b16 %v754
    %v1325 = vunpack.c.h.b16 %v754
    %v1326 = vunpack.c.l.b16 %v755
    %v1327 = vunpack.c.h.b16 %v755
    %v1328 = vunpack.c.l.b16 %v756
    %v1329 = vunpack.c.h.b16 %v756
    %v1330 = vunpack.c.l.b16 %v757
    %v1331 = vunpack.c.h.b16 %v757
    %v1332 = vunpack.c.l.b16 %v758
    %v1333 = vunpack.c.h.b16 %v758
    %v1334 = vunpack.c.l.b16 %v759
    %v1335 = vunpack.c.h.b16 %v759
    %v1336 = vunpack.c.l.b16 %v760
    %v1337 = vunpack.c.h.b16 %v760
    %v1338 = vunpack.c.l.b16 %v761
    %v1339 = vunpack.c.h.b16 %v761
    %v1340 = vunpack.c.l.b16 %v762
    %v1341 = vunpack.c.h.b16 %v762
    %v1342 = vunpack.c.l.b16 %v763
    %v1343 = vunpack.c.h.b16 %v763
    %v1344 = vunpack.c.l.b16 %v764
    %v1345 = vunpack.c.h.b16 %v764
    %v1346 = vunpack.c.l.b16 %v765
    %v1347 = vunpack.c.h.b16 %v765
    %v1348 = vunpack.c.l.b16 %v766
    %v1349 = vunpack.c.h.b16 %v766
    %v1350 = vunpack.c.l.b16 %v767
    %v1351 = vunpack.c.h.b16 %v767
    %v1352 = vunpack.c.l.b16 %v768
    %v1353 = vunpack.c.h.b16 %v768
    %v1354 = vunpack.c.l.b16 %v769
    %v1355 = vunpack.c.h.b16 %v769
    %v1356 = vunpack.c.l.b16 %v770
    %v1357 = vunpack.c.h.b16 %v770
    %v1358 = vunpack.c.l.b16 %v771
    %v1359 = vunpack.c.h.b16 %v771
    %v1360 = vunpack.c.l.b16 %v772
    %v1361 = vunpack.c.h.b16 %v772
    %v1362 = vunpack.c.l.b16 %v773
    %v1363 = vunpack.c.h.b16 %v773
    %v1364 = vunpack.c.l.b16 %v774
    %v1365 = vunpack.c.h.b16 %v774
    %v1366 = vunpack.c.l.b16 %v775
    %v1367 = vunpack.c.h.b16 %v775
    %v1368 = vunpack.c.l.b16 %v776
    %v1369 = vunpack.c.h.b16 %v776
    %v1370 = vunpack.c.l.b16 %v777
    %v1371 = vunpack.c.h.b16 %v777
    %v1372 = vunpack.c.l.b16 %v778
    %v1373 = vunpack.c.h.b16 %v778
    %v1374 = vunpack.c.l.b16 %v779
    %v1375 = vunpack.c.h.b16 %v779
    %v1376 = vunpack.c.l.b16 %v780
    %v1377 = vunpack.c.h.b16 %v780
    %v1378 = vunpack.c.l.b16 %v781
    %v1379 = vunpack.c.h.b16 %v781
    %v1380 = vunpack.c.l.b16 %v782
    %v1381 = vunpack.c.h.b16 %v782
    %v1382 = vunpack.c.l.b16 %v783
    %v1383 = vunpack.c.h.b16 %v783
    %v1384 = vunpack.c.l.b16 %v784
    %v1385 = vunpack.c.h.b16 %v784
    %v1386 = vunpack.c.l.b16 %v785
    %v1387 = vunpack.c.h.b16 %v785
    %v1388 = vunpack.c.l.b16 %v786
    %v1389 = vunpack.c.h.b16 %v786
    %v1390 = vunpack.c.l.b16 %v787
    %v1391 = vunpack.c.h.b16 %v787
    %v1392 = vunpack.c.l.b16 %v788
    %v1393 = vunpack.c.h.b16 %v788
    %v1394 = vunpack.c.l.b16 %v789
    %v1395 = vunpack.c.h.b16 %v789
    %v1396 = vunpack.c.l.b16 %v790
    %v1397 = vunpack.c.h.b16 %v790
    %v1398 = vunpack.c.l.b16 %v791
    %v1399 = vunpack.c.h.b16 %v791
    %v1400 = vunpack.c.l.b16 %v792
    %v1401 = vunpack.c.h.b16 %v792
    %v1402 = vunpack.c.l.b16 %v793
    %v1403 = vunpack.c.h.b16 %v793
    %v1404 = vunpack.c.l.b16 %v794
    %v1405 = vunpack.c.h.b16 %v794
    %v1406 = vunpack.c.l.b16 %v795
    %v1407 = vunpack.c.h.b16 %v795
    %v1408 = vunpack.c.l.b16 %v796
    %v1409 = vunpack.c.h.b16 %v796
    %v1410 = vunpack.c.l.b16 %v797
    %v1411 = vunpack.c.h.b16 %v797
    %v1412 = vunpack.c.l.b16 %v798
    %v1413 = vunpack.c.h.b16 %v798
    %v1414 = vunpack.c.l.b16 %v799
    %v1415 = vunpack.c.h.b16 %v799
    %v1416 = vunpack.c.l.b16 %v800
    %v1417 = vunpack.c.h.b16 %v800
    %v1418 = vunpack.c.l.b16 %v801
    %v1419 = vunpack.c.h.b16 %v801
    %v1420 = vunpack.c.l.b16 %v802
    %v1421 = vunpack.c.h.b16 %v802
    %v1422 = vunpack.c.l.b16 %v803
    %v1423 = vunpack.c.h.b16 %v803
    %v1424 = vunpack.c.l.b16 %v804
    %v1425 = vunpack.c.h.b16 %v804
    %v1426 = vunpack.c.l.b16 %v805
    %v1427 = vunpack.c.h.b16 %v805
    %v1428 = vunpack.c.l.b16 %v806
    %v1429 = vunpack.c.h.b16 %v806
    %v1430 = vunpack.c.l.b16 %v807
    %v1431 = vunpack.c.h.b16 %v807
    %v1432 = vunpack.c.l.b16 %v808
    %v1433 = vunpack.c.h.b16 %v808
    %v1434 = vunpack.c.l.b16 %v809
    %v1435 = vunpack.c.h.b16 %v809
    %v1436 = vunpack.c.l.b16 %v810
    %v1437 = vunpack.c.h.b16 %v810
    %v1438 = vunpack.c.l.b16 %v811
    %v1439 = vunpack.c.h.b16 %v811
    %v1440 = vunpack.c.l.b16 %v812
    %v1441 = vunpack.c.h.b16 %v812
    %v1442 = vunpack.c.l.b16 %v813
    %v1443 = vunpack.c.h.b16 %v813
    %v1444 = vunpack.c.l.b16 %v814
    %v1445 = vunpack.c.h.b16 %v814
    %v1446 = vunpack.c.l.b16 %v815
    %v1447 = vunpack.c.h.b16 %v815
    %v1448 = vunpack.c.l.b16 %v816
    %v1449 = vunpack.c.h.b16 %v816
    %v1450 = vunpack.c.l.b16 %v817
    %v1451 = vunpack.c.h.b16 %v817
    %v1452 = vunpack.c.l.b16 %v818
    %v1453 = vunpack.c.h.b16 %v818
    %v1454 = vunpack.c.l.b16 %v819
    %v1455 = vunpack.c.h.b16 %v819
    %v1456 = vunpack.c.l.b16 %v820
    %v1457 = vunpack.c.h.b16 %v820
    %v1458 = vunpack.c.l.b16 %v821
    %v1459 = vunpack.c.h.b16 %v821
    %v1460 = vunpack.c.l.b16 %v822
    %v1461 = vunpack.c.h.b16 %v822
    %v1462 = vunpack.c.l.b16 %v823
    %v1463 = vunpack.c.h.b16 %v823
    %v1464 = vunpack.c.l.b16 %v824
    %v1465 = vunpack.c.h.b16 %v824
    %v1466 = vunpack.c.l.b16 %v825
    %v1467 = vunpack.c.h.b16 %v825
    %v1468 = vunpack.c.l.b16 %v826
    %v1469 = vunpack.c.h.b16 %v826
    %v1470 = vunpack.c.l.b16 %v827
    %v1471 = vunpack.c.h.b16 %v827
    %v1472 = vunpack.c.l.b16 %v828
    %v1473 = vunpack.c.h.b16 %v828
    %v1474 = vunpack.c.l.b16 %v829
    %v1475 = vunpack.c.h.b16 %v829
    %v1476 = vunpack.c.l.b16 %v830
    %v1477 = vunpack.c.h.b16 %v830
    %v1478 = vunpack.c.l.b16 %v831
    %v1479 = vunpack.c.h.b16 %v831
    %v1480 = vunpack.c.l.b16 %v832
    %v1481 = vunpack.c.h.b16 %v832
    %v1482 = vunpack.c.l.b16 %v833
    %v1483 = vunpack.c.h.b16 %v833
    %v1484 = vunpack.c.l.b16 %v834
    %v1485 = vunpack.c.h.b16 %v834
    %v1486 = vunpack.c.l.b16 %v835
    %v1487 = vunpack.c.h.b16 %v835
    %v1488 = vunpack.c.l.b16 %v836
    %v1489 = vunpack.c.h.b16 %v836
    %v1490 = vunpack.c.l.b16 %v837
    %v1491 = vunpack.c.h.b16 %v837
    %v1492 = vunpack.c.l.b16 %v838
    %v1493 = vunpack.c.h.b16 %v838
    %v1494 = vunpack.c.l.b16 %v839
    %v1495 = vunpack.c.h.b16 %v839
    %v1496 = vunpack.c.l.b16 %v840
    %v1497 = vunpack.c.h.b16 %v840
    %v1498 = vunpack.c.l.b16 %v841
    %v1499 = vunpack.c.h.b16 %v841
    %v1500 = vunpack.c.l.b16 %v842
    %v1501 = vunpack.c.h.b16 %v842
    %v1502 = vunpack.c.l.b16 %v843
    %v1503 = vunpack.c.h.b16 %v843
    %v1504 = vunpack.c.l.b16 %v844
    %v1505 = vunpack.c.h.b16 %v844
    %v1506 = vunpack.c.l.b16 %v845
    %v1507 = vunpack.c.h.b16 %v845
    %v1508 = vunpack.c.l.b16 %v846
    %v1509 = vunpack.c.h.b16 %v846
    %v1510 = vunpack.c.l.b16 %v847
    %v1511 = vunpack.c.h.b16 %v847
    %v1512 = vunpack.c.l.b16 %v848
    %v1513 = vunpack.c.h.b16 %v848
    %v1514 = vunpack.c.l.b16 %v849
    %v1515 = vunpack.c.h.b16 %v849
    %v1516 = vunpack.c.l.b16 %v850
    %v1517 = vunpack.c.h.b16 %v850
    %v1518 = vunpack.c.l.b16 %v851
    %v1519 = vunpack.c.h.b16 %v851
    %v1520 = vunpack.c.l.b16 %v852
    %v1521 = vunpack.c.h.b16 %v852
    %v1522 = vunpack.c.l.b16 %v853
    %v1523 = vunpack.c.h.b16 %v853
    %v1524 = vunpack.c.l.b16 %v854
    %v1525 = vunpack.c.h.b16 %v854
    %v1526 = vunpack.c.l.b16 %v855
    %v1527 = vunpack.c.h.b16 %v855
    %v1528 = vunpack.c.l.b16 %v856
    %v1529 = vunpack.c.h.b16 %v856
    %v1530 = vunpack.c.l.b16 %v857
    %v1531 = vunpack.c.h.b16 %v857
    %v1532 = vunpack.c.l.b16 %v858
    %v1533 = vunpack.c.h.b16 %v858
    %v1534 = vunpack.c.l.b16 %v859
    %v1535 = vunpack.c.h.b16 %v859
    %v1536 = vunpack.c.l.b16 %v860
    %v1537 = vunpack.c.h.b16 %v860
    %v1538 = vunpack.c.l.b16 %v861
    %v1539 = vunpack.c.h.b16 %v861
    %v1540 = vunpack.c.l.b16 %v862
    %v1541 = vunpack.c.h.b16 %v862
    %v1542 = vunpack.c.l.b16 %v863
    %v1543 = vunpack.c.h.b16 %v863
    %v1544 = vunpack.c.l.b16 %v864
    %v1545 = vunpack.c.h.b16 %v864
    %v1546 = vunpack.c.l.b16 %v865
    %v1547 = vunpack.c.h.b16 %v865
    %v1548 = vunpack.c.l.b16 %v866
    %v1549 = vunpack.c.h.b16 %v866
    %v1550 = vunpack.c.l.b16 %v867
    %v1551 = vunpack.c.h.b16 %v867
    %v1552 = vunpack.c.l.b16 %v868
    %v1553 = vunpack.c.h.b16 %v868
    %v1554 = vunpack.c.l.b16 %v869
    %v1555 = vunpack.c.h.b16 %v869
    %v1556 = vunpack.c.l.b16 %v870
    %v1557 = vunpack.c.h.b16 %v870
    %v1558 = vunpack.c.l.b16 %v871
    %v1559 = vunpack.c.h.b16 %v871
    %v1560 = vunpack.c.l.b16 %v872
    %v1561 = vunpack.c.h.b16 %v872
    %v1562 = vunpack.c.l.b16 %v873
    %v1563 = vunpack.c.h.b16 %v873
    %v1564 = vunpack.c.l.b16 %v874
    %v1565 = vunpack.c.h.b16 %v874
    %v1566 = vunpack.c.l.b16 %v875
    %v1567 = vunpack.c.h.b16 %v875
    %v1568 = vunpack.c.l.b16 %v876
    %v1569 = vunpack.c.h.b16 %v876
    %v1570 = vunpack.c.l.b16 %v877
    %v1571 = vunpack.c.h.b16 %v877
    %v1572 = vunpack.c.l.b16 %v878
    %v1573 = vunpack.c.h.b16 %v878
    %v1574 = vunpack.c.l.b16 %v879
    %v1575 = vunpack.c.h.b16 %v879
    %v1576 = vunpack.c.l.b16 %v880
    %v1577 = vunpack.c.h.b16 %v880
    %v1578 = vunpack.c.l.b16 %v881
    %v1579 = vunpack.c.h.b16 %v881
    %v1580 = vunpack.c.l.b16 %v882
    %v1581 = vunpack.c.h.b16 %v882
    %v1582 = vunpack.c.l.b16 %v883
    %v1583 = vunpack.c.h.b16 %v883
    %v1584 = vunpack.c.l.b16 %v884
    %v1585 = vunpack.c.h.b16 %v884
    %v1586 = vunpack.c.l.b16 %v885
    %v1587 = vunpack.c.h.b16 %v885
    %v1588 = vunpack.c.l.b16 %v886
    %v1589 = vunpack.c.h.b16 %v886
    %v1590 = vunpack.c.l.b16 %v887
    %v1591 = vunpack.c.h.b16 %v887
    %v1592 = vunpack.c.l.b16 %v888
    %v1593 = vunpack.c.h.b16 %v888
    %v1594 = vunpack.c.l.b16 %v889
    %v1595 = vunpack.c.h.b16 %v889
    %v1596 = vunpack.c.l.b16 %v890
    %v1597 = vunpack.c.h.b16 %v890
    %v1598 = vunpack.c.l.b16 %v891
    %v1599 = vunpack.c.h.b16 %v891
    %v1600 = vunpack.c.l.b16 %v892
    %v1601 = vunpack.c.h.b16 %v892
    %v1602 = vunpack.c.l.b16 %v893
    %v1603 = vunpack.c.h.b16 %v893
    %v1604 = vunpack.c.l.b16 %v894
    %v1605 = vunpack.c.h.b16 %v894
    %v1606 = vunpack.c.l.b16 %v895
    %v1607 = vunpack.c.h.b16 %v895
    %v1608 = vunpack.c.l.b16 %v896
    %v1609 = vunpack.c.h.b16 %v896
    %v1610 = vunpack.c.l.b16 %v897
    %v1611 = vunpack.c.h.b16 %v897
    %v1612 = vunpack.c.l.b16 %v898
    %v1613 = vunpack.c.h.b16 %v898
    %v1614 = vunpack.c.l.b16 %v899
    %v1615 = vunpack.c.h.b16 %v899
    %v1616 = vunpack.c.l.b16 %v900
    %v1617 = vunpack.c.h.b16 %v900
    %v1618 = vunpack.c.l.b16 %v901
    %v1619 = vunpack.c.h.b16 %v901
    %v1620 = vunpack.c.l.b16 %v902
    %v1621 = vunpack.c.h.b16 %v902
    %v1622 = vunpack.c.l.b16 %v903
    %v1623 = vunpack.c.h.b16 %v903
    %v1624 = vunpack.c.l.b16 %v904
    %v1625 = vunpack.c.h.b16 %v904
    %v1626 = vunpack.c.l.b16 %v905
    %v1627 = vunpack.c.h.b16 %v905
    %v1628 = vunpack.c.l.b16 %v906
    %v1629 = vunpack.c.h.b16 %v906
    %v1630 = vunpack.c.l.b16 %v907
    %v1631 = vunpack.c.h.b16 %v907
    %v1632 = vunpack.c.l.b16 %v908
    %v1633 = vunpack.c.h.b16 %v908
    %v1634 = vunpack.c.l.b16 %v909
    %v1635 = vunpack.c.h.b16 %v909
    %v1636 = vunpack.c.l.b16 %v910
    %v1637 = vunpack.c.h.b16 %v910
    %v1638 = vunpack.c.l.b16 %v911
    %v1639 = vunpack.c.h.b16 %v911
    %v1640 = vunpack.c.l.b16 %v912
    %v1641 = vunpack.c.h.b16 %v912
    %v1642 = vunpack.c.l.b16 %v913
    %v1643 = vunpack.c.h.b16 %v913
    %v1644 = vunpack.c.l.b16 %v914
    %v1645 = vunpack.c.h.b16 %v914
    %v1646 = vunpack.c.l.b16 %v915
    %v1647 = vunpack.c.h.b16 %v915
    %v1648 = vunpack.c.l.b16 %v916
    %v1649 = vunpack.c.h.b16 %v916
    %v1650 = vunpack.c.l.b16 %v917
    %v1651 = vunpack.c.h.b16 %v917
    %v1652 = vunpack.c.l.b16 %v918
    %v1653 = vunpack.c.h.b16 %v918
    %v1654 = vunpack.c.l.b16 %v919
    %v1655 = vunpack.c.h.b16 %v919
    %v1656 = vunpack.c.l.b16 %v920
    %v1657 = vunpack.c.h.b16 %v920
    %v1658 = vunpack.c.l.b16 %v921
    %v1659 = vunpack.c.h.b16 %v921
    %v1660 = vunpack.c.l.b16 %v922
    %v1661 = vunpack.c.h.b16 %v922
    %v1662 = vunpack.c.l.b16 %v923
    %v1663 = vunpack.c.h.b16 %v923
    %v1664 = vunpack.c.l.b16 %v924
    %v1665 = vunpack.c.h.b16 %v924
    %v1666 = vunpack.c.l.b16 %v925
    %v1667 = vunpack.c.h.b16 %v925
    %v1668 = vunpack.c.l.b16 %v926
    %v1669 = vunpack.c.h.b16 %v926
    %v1670 = vunpack.c.l.b16 %v927
    %v1671 = vunpack.c.h.b16 %v927
    %v1672 = vunpack.c.l.b16 %v928
    %v1673 = vunpack.c.h.b16 %v928
    %v1674 = vunpack.c.l.b16 %v929
    %v1675 = vunpack.c.h.b16 %v929
    %v1676 = vunpack.c.l.b16 %v930
    %v1677 = vunpack.c.h.b16 %v930
    %v1678 = vunpack.c.l.b16 %v931
    %v1679 = vunpack.c.h.b16 %v931
    %v1680 = vunpack.c.l.b16 %v932
    %v1681 = vunpack.c.h.b16 %v932
    %v1682 = vunpack.c.l.b16 %v933
    %v1683 = vunpack.c.h.b16 %v933
    %v1684 = vunpack.c.l.b16 %v934
    %v1685 = vunpack.c.h.b16 %v934
    %v1686 = vunpack.c.l.b16 %v935
    %v1687 = vunpack.c.h.b16 %v935
    %v1688 = vunpack.c.l.b16 %v936
    %v1689 = vunpack.c.h.b16 %v936
    %v1690 = vunpack.c.l.b16 %v937
    %v1691 = vunpack.c.h.b16 %v937
    %v1692 = vunpack.c.l.b16 %v938
    %v1693 = vunpack.c.h.b16 %v938
    %v1694 = vunpack.c.l.b16 %v939
    %v1695 = vunpack.c.h.b16 %v939
    %v1696 = vunpack.c.l.b16 %v940
    %v1697 = vunpack.c.h.b16 %v940
    %v1698 = vunpack.c.l.b16 %v941
    %v1699 = vunpack.c.h.b16 %v941
    %v1700 = vunpack.c.l.b16 %v942
    %v1701 = vunpack.c.h.b16 %v942
    %v1702 = vunpack.c.l.b16 %v943
    %v1703 = vunpack.c.h.b16 %v943
    %v1704 = vunpack.c.l.b16 %v944
    %v1705 = vunpack.c.h.b16 %v944
    %v1706 = vunpack.c.l.b16 %v945
    %v1707 = vunpack.c.h.b16 %v945
    %v1708 = vunpack.c.l.b16 %v946
    %v1709 = vunpack.c.h.b16 %v946
    %v1710 = vunpack.c.l.b16 %v947
    %v1711 = vunpack.c.h.b16 %v947
    %v1712 = vunpack.c.l.b16 %v948
    %v1713 = vunpack.c.h.b16 %v948
    %v1714 = vunpack.c.l.b16 %v949
    %v1715 = vunpack.c.h.b16 %v949
    %v1716 = vunpack.c.l.b16 %v950
    %v1717 = vunpack.c.h.b16 %v950
    %v1718 = vunpack.c.l.b16 %v951
    %v1719 = vunpack.c.h.b16 %v951
    %v1720 = vunpack.c.l.b16 %v952
    %v1721 = vunpack.c.h.b16 %v952
    %v1722 = vunpack.c.l.b16 %v953
    %v1723 = vunpack.c.h.b16 %v953
    %v1724 = vunpack.c.l.b16 %v954
    %v1725 = vunpack.c.h.b16 %v954
    %v1726 = vunpack.c.l.b16 %v955
    %v1727 = vunpack.c.h.b16 %v955
    %v1728 = vunpack.c.l.b16 %v956
    %v1729 = vunpack.c.h.b16 %v956
    %v1730 = vunpack.c.l.b16 %v957
    %v1731 = vunpack.c.h.b16 %v957
    %v1732 = vunpack.c.l.b16 %v958
    %v1733 = vunpack.c.h.b16 %v958
    %v1734 = vunpack.c.l.b16 %v959
    %v1735 = vunpack.c.h.b16 %v959
    %v1736 = vunpack.c.l.b16 %v960
    %v1737 = vunpack.c.h.b16 %v960
    %v1738 = vunpack.c.l.b16 %v961
    %v1739 = vunpack.c.h.b16 %v961
    %v1740 = vunpack.c.l.b16 %v962
    %v1741 = vunpack.c.h.b16 %v962
    %v1742 = vunpack.c.l.b16 %v963
    %v1743 = vunpack.c.h.b16 %v963
    %v1744 = vunpack.c.l.b16 %v964
    %v1745 = vunpack.c.h.b16 %v964
    %v1746 = vunpack.c.l.b16 %v965
    %v1747 = vunpack.c.h.b16 %v965
    %v1748 = vunpack.c.l.b16 %v966
    %v1749 = vunpack.c.h.b16 %v966
    %v1750 = vunpack.c.l.b16 %v967
    %v1751 = vunpack.c.h.b16 %v967
    %v1752 = vunpack.c.l.b16 %v968
    %v1753 = vunpack.c.h.b16 %v968
    %v1754 = vunpack.c.l.b16 %v969
    %v1755 = vunpack.c.h.b16 %v969
    %v1756 = vunpack.c.l.b16 %v970
    %v1757 = vunpack.c.h.b16 %v970
    %v1758 = vunpack.c.l.b16 %v971
    %v1759 = vunpack.c.h.b16 %v971
    %v1760 = vunpack.c.l.b16 %v972
    %v1761 = vunpack.c.h.b16 %v972
    %v1762 = vunpack.c.l.b16 %v973
    %v1763 = vunpack.c.h.b16 %v973
    %v1764 = vunpack.c.l.b16 %v974
    %v1765 = vunpack.c.h.b16 %v974
    %v1766 = vunpack.c.l.b16 %v975
    %v1767 = vunpack.c.h.b16 %v975
    %v1768 = vunpack.c.l.b16 %v976
    %v1769 = vunpack.c.h.b16 %v976
    %v1770 = vunpack.c.l.b16 %v977
    %v1771 = vunpack.c.h.b16 %v977
    %v1772 = vunpack.c.l.b16 %v978
    %v1773 = vunpack.c.h.b16 %v978
    %v1774 = vunpack.c.l.b16 %v979
    %v1775 = vunpack.c.h.b16 %v979
    %v1776 = vunpack.c.l.b16 %v980
    %v1777 = vunpack.c.h.b16 %v980
    %v1778 = vunpack.c.l.b16 %v981
    %v1779 = vunpack.c.h.b16 %v981
    %v1780 = vunpack.c.l.b16 %v982
    %v1781 = vunpack.c.h.b16 %v982
    %v1782 = vunpack.c.l.b16 %v983
    %v1783 = vunpack.c.h.b16 %v983
    %v1784 = vunpack.c.l.b16 %v984
    %v1785 = vunpack.c.h.b16 %v984
    %v1786 = vunpack.c.l.b16 %v985
    %v1787 = vunpack.c.h.b16 %v985
    %v1788 = vunpack.c.l.b16 %v986
    %v1789 = vunpack.c.h.b16 %v986
    %v1790 = vunpack.c.l.b16 %v987
    %v1791 = vunpack.c.h.b16 %v987
    %v1792 = vunpack.c.l.b16 %v988
    %v1793 = vunpack.c.h.b16 %v988
    %v1794 = vunpack.c.l.b16 %v989
    %v1795 = vunpack.c.h.b16 %v989
    %v1796 = vunpack.c.l.b16 %v990
    %v1797 = vunpack.c.h.b16 %v990
    %v1798 = vunpack.c.l.b16 %v991
    %v1799 = vunpack.c.h.b16 %v991
    %v1800 = vunpack.c.l.b16 %v992
    %v1801 = vunpack.c.h.b16 %v992
    %v1802 = vunpack.c.l.b16 %v993
    %v1803 = vunpack.c.h.b16 %v993
    %v1804 = vpack.c.b16 %v1300, %v1292
    %v1805 = vpack.c.b16 %v1301, %v1293
    %v1806 = vpack.c.b16 %v1302, %v1294
    %v1807 = vpack.c.b16 %v1303, %v1295
    %v1808 = vpack.c.b16 %v1304, %v1296
    %v1809 = vpack.c.b16 %v1305, %v1297
    %v1810 = vpack.c.b16 %v1306, %v1298
    %v1811 = vpack.c.b16 %v1307, %v1299
    %v1812 = vpack.c.b16 %v1316, %v1308
    %v1813 = vpack.c.b16 %v1317, %v1309
    %v1814 = vpack.c.b16 %v1318, %v1310
    %v1815 = vpack.c.b16 %v1319, %v1311
    %v1816 = vpack.c.b16 %v1320, %v1312
    %v1817 = vpack.c.b16 %v1321, %v1313
    %v1818 = vpack.c.b16 %v1322, %v1314
    %v1819 = vpack.c.b16 %v1323, %v1315
    %v1820 = vpack.c.b16 %v1332, %v1324
    %v1821 = vpack.c.b16 %v1333, %v1325
    %v1822 = vpack.c.b16 %v1334, %v1326
    %v1823 = vpack.c.b16 %v1335, %v1327
    %v1824 = vpack.c.b16 %v1336, %v1328
    %v1825 = vpack.c.b16 %v1337, %v1329
    %v1826 = vpack.c.b16 %v1338, %v1330
    %v1827 = vpack.c.b16 %v1339, %v1331
    %v1828 = vpack.c.b16 %v1348, %v1340
    %v1829 = vpack.c.b16 %v1349, %v1341
    %v1830 = vpack.c.b16 %v1350, %v1342
    %v1831 = vpack.c.b16 %v1351, %v1343
    %v1832 = vpack.c.b16 %v1352, %v1344
    %v1833 = vpack.c.b16 %v1353, %v1345
    %v1834 = vpack.c.b16 %v1354, %v1346
    %v1835 = vpack.c.b16 %v1355, %v1347
    %v1836 = vpack.c.b16 %v1364, %v1356
    %v1837 = vpack.c.b16 %v1365, %v1357
    %v1838 = vpack.c.b16 %v1366, %v1358
    %v1839 = vpack.c.b16 %v1367, %v1359
    %v1840 = vpack.c.b16 %v1368, %v1360
    %v1841 = vpack.c.b16 %v1369, %v1361
    %v1842 = vpack.c.b16 %v1370, %v1362
    %v1843 = vpack.c.b16 %v1371, %v1363
    %v1844 = vpack.c.b16 %v1380, %v1372
    %v1845 = vpack.c.b16 %v1381, %v1373
    %v1846 = vpack.c.b16 %v1382, %v1374
    %v1847 = vpack.c.b16 %v1383, %v1375
    %v1848 = vpack.c.b16 %v1384, %v1376
    %v1849 = vpack.c.b16 %v1385, %v1377
    %v1850 = vpack.c.b16 %v1386, %v1378
    %v1851 = vpack.c.b16 %v1387, %v1379
    %v1852 = vpack.c.b16 %v1396, %v1388
    %v1853 = vpack.c.b16 %v1397, %v1389
    %v1854 = vpack.c.b16 %v1398, %v1390
    %v1855 = vpack.c.b16 %v1399, %v1391
    %v1856 = vpack.c.b16 %v1400, %v1392
    %v1857 = vpack.c.b16 %v1401, %v1393
    %v1858 = vpack.c.b16 %v1402, %v1394
    %v1859 = vpack.c.b16 %v1403, %v1395
    %v1860 = vpack.c.b16 %v1412, %v1404
    %v1861 = vpack.c.b16 %v1413, %v1405
    %v1862 = vpack.c.b16 %v1414, %v1406
    %v1863 = vpack.c.b16 %v1415, %v1407
    %v1864 = vpack.c.b16 %v1416, %v1408
    %v1865 = vpack.c.b16 %v1417, %v1409
    %v1866 = vpack.c.b16 %v1418, %v1410
    %v1867 = vpack.c.b16 %v1419, %v1411
    %v1868 = vpack.c.b16 %v1428, %v1420
    %v1869 = vpack.c.b16 %v1429, %v1421
    %v1870 = vpack.c.b16 %v1430, %v1422
    %v1871 = vpack.c.b16 %v1431, %v1423
    %v1872 = vpack.c.b16 %v1432, %v1424
    %v1873 = vpack.c.b16 %v1433, %v1425
    %v1874 = vpack.c.b16 %v1434, %v1426
    %v1875 = vpack.c.b16 %v1435, %v1427
    %v1876 = vpack.c.b16 %v1444, %v1436
    %v1877 = vpack.c.b16 %v1445, %v1437
    %v1878 = vpack.c.b16 %v1446, %v1438
    %v1879 = vpack.c.b16 %v1447, %v1439
    %v1880 = vpack.c.b16 %v1448, %v1440
    %v1881 = vpack.c.b16 %v1449, %v1441
    %v1882 = vpack.c.b16 %v1450, %v1442
    %v1883 = vpack.c.b16 %v1451, %v1443
    %v1884 = vpack.c.b16 %v1460, %v1452
    %v1885 = vpack.c.b16 %v1461, %v1453
    %v1886 = vpack.c.b16 %v1462, %v1454
    %v1887 = vpack.c.b16 %v1463, %v1455
    %v1888 = vpack.c.b16 %v1464, %v1456
    %v1889 = vpack.c.b16 %v1465, %v1457
    %v1890 = vpack.c.b16 %v1466, %v1458
    %v1891 = vpack.c.b16 %v1467, %v1459
    %v1892 = vpack.c.b16 %v1476, %v1468
    %v1893 = vpack.c.b16 %v1477, %v1469
    %v1894 = vpack.c.b16 %v1478, %v1470
    %v1895 = vpack.c.b16 %v1479, %v1471
    %v1896 = vpack.c.b16 %v1480, %v1472
    %v1897 = vpack.c.b16 %v1481, %v1473
    %v1898 = vpack.c.b16 %v1482, %v1474
    %v1899 = vpack.c.b16 %v1483, %v1475
    %v1900 = vpack.c.b16 %v1492, %v1484
    %v1901 = vpack.c.b16 %v1493, %v1485
    %v1902 = vpack.c.b16 %v1494, %v1486
    %v1903 = vpack.c.b16 %v1495, %v1487
    %v1904 = vpack.c.b16 %v1496, %v1488
    %v1905 = vpack.c.b16 %v1497, %v1489
    %v1906 = vpack.c.b16 %v1498, %v1490
    %v1907 = vpack.c.b16 %v1499, %v1491
    %v1908 = vpack.c.b16 %v1508, %v1500
    %v1909 = vpack.c.b16 %v1509, %v1501
    %v1910 = vpack.c.b16 %v1510, %v1502
    %v1911 = vpack.c.b16 %v1511, %v1503
    %v1912 = vpack.c.b16 %v1512, %v1504
    %v1913 = vpack.c.b16 %v1513, %v1505
    %v1914 = vpack.c.b16 %v1514, %v1506
    %v1915 = vpack.c.b16 %v1515, %v1507
    %v1916 = vpack.c.b16 %v1524, %v1516
    %v1917 = vpack.c.b16 %v1525, %v1517
    %v1918 = vpack.c.b16 %v1526, %v1518
    %v1919 = vpack.c.b16 %v1527, %v1519
    %v1920 = vpack.c.b16 %v1528, %v1520
    %v1921 = vpack.c.b16 %v1529, %v1521
    %v1922 = vpack.c.b16 %v1530, %v1522
    %v1923 = vpack.c.b16 %v1531, %v1523
    %v1924 = vpack.c.b16 %v1540, %v1532
    %v1925 = vpack.c.b16 %v1541, %v1533
    %v1926 = vpack.c.b16 %v1542, %v1534
    %v1927 = vpack.c.b16 %v1543, %v1535
    %v1928 = vpack.c.b16 %v1544, %v1536
    %v1929 = vpack.c.b16 %v1545, %v1537
    %v1930 = vpack.c.b16 %v1546, %v1538
    %v1931 = vpack.c.b16 %v1547, %v1539
    %v1932 = vpack.c.b16 %v1556, %v1548
    %v1933 = vpack.c.b16 %v1557, %v1549
    %v1934 = vpack.c.b16 %v1558, %v1550
    %v1935 = vpack.c.b16 %v1559, %v1551
    %v1936 = vpack.c.b16 %v1560, %v1552
    %v1937 = vpack.c.b16 %v1561, %v1553
    %v1938 = vpack.c.b16 %v1562, %v1554
    %v1939 = vpack.c.b16 %v1563, %v1555
    %v1940 = vpack.c.b16 %v1572, %v1564
    %v1941 = vpack.c.b16 %v1573, %v1565
    %v1942 = vpack.c.b16 %v1574, %v1566
    %v1943 = vpack.c.b16 %v1575, %v1567
    %v1944 = vpack.c.b16 %v1576, %v1568
    %v1945 = vpack.c.b16 %v1577, %v1569
    %v1946 = vpack.c.b16 %v1578, %v1570
    %v1947 = vpack.c.b16 %v1579, %v1571
    %v1948 = vpack.c.b16 %v1588, %v1580
    %v1949 = vpack.c.b16 %v1589, %v1581
    %v1950 = vpack.c.b16 %v1590, %v1582
    %v1951 = vpack.c.b16 %v1591, %v1583
    %v1952 = vpack.c.b16 %v1592, %v1584
    %v1953 = vpack.c.b16 %v1593, %v1585
    %v1954 = vpack.c.b16 %v1594, %v1586
    %v1955 = vpack.c.b16 %v1595, %v1587
    %v1956 = vpack.c.b16 %v1604, %v1596
    %v1957 = vpack.c.b16 %v1605, %v1597
    %v1958 = vpack.c.b16 %v1606, %v1598
    %v1959 = vpack.c.b16 %v1607, %v1599
    %v1960 = vpack.c.b16 %v1608, %v1600
    %v1961 = vpack.c.b16 %v1609, %v1601
    %v1962 = vpack.c.b16 %v1610, %v1602
    %v1963 = vpack.c.b16 %v1611, %v1603
    %v1964 = vpack.c.b16 %v1620, %v1612
    %v1965 = vpack.c.b16 %v1621, %v1613
    %v1966 = vpack.c.b16 %v1622, %v1614
    %v1967 = vpack.c.b16 %v1623, %v1615
    %v1968 = vpack.c.b16 %v1624, %v1616
    %v1969 = vpack.c.b16 %v1625, %v1617
    %v1970 = vpack.c.b16 %v1626, %v1618
    %v1971 = vpack.c.b16 %v1627, %v1619
    %v1972 = vpack.c.b16 %v1636, %v1628
    %v1973 = vpack.c.b16 %v1637, %v1629
    %v1974 = vpack.c.b16 %v1638, %v1630
    %v1975 = vpack.c.b16 %v1639, %v1631
    %v1976 = vpack.c.b16 %v1640, %v1632
    %v1977 = vpack.c.b16 %v1641, %v1633
    %v1978 = vpack.c.b16 %v1642, %v1634
    %v1979 = vpack.c.b16 %v1643, %v1635
    %v1980 = vpack.c.b16 %v1652, %v1644
    %v1981 = vpack.c.b16 %v1653, %v1645
    %v1982 = vpack.c.b16 %v1654, %v1646
    %v1983 = vpack.c.b16 %v1655, %v1647
    %v1984 = vpack.c.b16 %v1656, %v1648
    %v1985 = vpack.c.b16 %v1657, %v1649
    %v1986 = vpack.c.b16 %v1658, %v1650
    %v1987 = vpack.c.b16 %v1659, %v1651
    %v1988 = vpack.c.b16 %v1668, %v1660
    %v1989 = vpack.c.b16 %v1669, %v1661
    %v1990 = vpack.c.b16 %v1670, %v1662
    %v1991 = vpack.c.b16 %v1671, %v1663
    %v1992 = vpack.c.b16 %v1672, %v1664
    %v1993 = vpack.c.b16 %v1673, %v1665
    %v1994 = vpack.c.b16 %v1674, %v1666
    %v1995 = vpack.c.b16 %v1675, %v1667
    %v1996 = vpack.c.b16 %v1684, %v1676
    %v1997 = vpack.c.b16 %v1685, %v1677
    %v1998 = vpack.c.b16 %v1686, %v1678
    %v1999 = vpack.c.b16 %v1687, %v1679
    %v2000 = vpack.c.b16 %v1688, %v1680
    %v2001 = vpack.c.b16 %v1689, %v1681
    %v2002 = vpack.c.b16 %v1690, %v1682
    %v2003 = vpack.c.b16 %v1691, %v1683
    %v2004 = vpack.c.b16 %v1700, %v1692
    %v2005 = vpack.c.b16 %v1701, %v1693
    %v2006 = vpack.c.b16 %v1702, %v1694
    %v2007 = vpack.c.b16 %v1703, %v1695
    %v2008 = vpack.c.b16 %v1704, %v1696
    %v2009 = vpack.c.b16 %v1705, %v1697
    %v2010 = vpack.c.b16 %v1706, %v1698
    %v2011 = vpack.c.b16 %v1707, %v1699
    %v2012 = vpack.c.b16 %v1716, %v1708
    %v2013 = vpack.c.b16 %v1717, %v1709
    %v2014 = vpack.c.b16 %v1718, %v1710
    %v2015 = vpack.c.b16 %v1719, %v1711
    %v2016 = vpack.c.b16 %v1720, %v1712
    %v2017 = vpack.c.b16 %v1721, %v1713
    %v2018 = vpack.c.b16 %v1722, %v1714
    %v2019 = vpack.c.b16 %v1723, %v1715
    %v2020 = vpack.c.b16 %v1732, %v1724
    %v2021 = vpack.c.b16 %v1733, %v1725
    %v2022 = vpack.c.b16 %v1734, %v1726
    %v2023 = vpack.c.b16 %v1735, %v1727
    %v2024 = vpack.c.b16 %v1736, %v1728
    %v2025 = vpack.c.b16 %v1737, %v1729
    %v2026 = vpack.c.b16 %v1738, %v1730
    %v2027 = vpack.c.b16 %v1739, %v1731
    %v2028 = vpack.c.b16 %v1748, %v1740
    %v2029 = vpack.c.b16 %v1749, %v1741
    %v2030 = vpack.c.b16 %v1750, %v1742
    %v2031 = vpack.c.b16 %v1751, %v1743
    %v2032 = vpack.c.b16 %v1752, %v1744
    %v2033 = vpack.c.b16 %v1753, %v1745
    %v2034 = vpack.c.b16 %v1754, %v1746
    %v2035 = vpack.c.b16 %v1755, %v1747
    %v2036 = vpack.c.b16 %v1764, %v1756
    %v2037 = vpack.c.b16 %v1765, %v1757
    %v2038 = vpack.c.b16 %v1766, %v1758
    %v2039 = vpack.c.b16 %v1767, %v1759
    %v2040 = vpack.c.b16 %v1768, %v1760
    %v2041 = vpack.c.b16 %v1769, %v1761
    %v2042 = vpack.c.b16 %v1770, %v1762
    %v2043 = vpack.c.b16 %v1771, %v1763
    %v2044 = vpack.c.b16 %v1780, %v1772
    %v2045 = vpack.c.b16 %v1781, %v1773
    %v2046 = vpack.c.b16 %v1782, %v1774
    %v2047 = vpack.c.b16 %v1783, %v1775
    %v2048 = vpack.c.b16 %v1784, %v1776
    %v2049 = vpack.c.b16 %v1785, %v1777
    %v2050 = vpack.c.b16 %v1786, %v1778
    %v2051 = vpack.c.b16 %v1787, %v1779
    %v2052 = vpack.c.b16 %v1796, %v1788
    %v2053 = vpack.c.b16 %v1797, %v1789
    %v2054 = vpack.c.b16 %v1798, %v1790
    %v2055 = vpack.c.b16 %v1799, %v1791
    %v2056 = vpack.c.b16 %v1800, %v1792
    %v2057 = vpack.c.b16 %v1801, %v1793
    %v2058 = vpack.c.b16 %v1802, %v1794
    %v2059 = vpack.c.b16 %v1803, %v1795
    %2316 = vmatprep.subr.bf16.mxu0 %v1805
    %2317 = vmatpush1.bf16.msra.mxu0 %v1804
    %2318 = vmatprep.subr.bf16.mxu0 %v1813
    %2319 = vmatpush1.bf16.msra.mxu0 %v1812
    %2320 = vmatprep.subr.bf16.mxu0 %v1821
    %2321 = vmatpush1.bf16.msra.mxu0 %v1820
    %2322 = vmatprep.subr.bf16.mxu0 %v1829
    %2323 = vmatpush1.bf16.msra.mxu0 %v1828
    %2324 = vmatprep.subr.bf16.mxu0 %v1837
    %2325 = vmatpush1.bf16.msra.mxu0 %v1836
    %2326 = vmatprep.subr.bf16.mxu0 %v1845
    %2327 = vmatpush1.bf16.msra.mxu0 %v1844
    %2328 = vmatprep.subr.bf16.mxu0 %v1853
    %2329 = vmatpush1.bf16.msra.mxu0 %v1852
    %2330 = vmatprep.subr.bf16.mxu0 %v1861
    %2331 = vmatpush1.bf16.msra.mxu0 %v1860
    %2332 = vmatprep.subr.bf16.mxu0 %v1869
    %2333 = vmatpush1.bf16.msra.mxu0 %v1868
    %2334 = vmatprep.subr.bf16.mxu0 %v1877
    %2335 = vmatpush1.bf16.msra.mxu0 %v1876
    %2336 = vmatprep.subr.bf16.mxu0 %v1885
    %2337 = vmatpush1.bf16.msra.mxu0 %v1884
    %2338 = vmatprep.subr.bf16.mxu0 %v1893
    %2339 = vmatpush1.bf16.msra.mxu0 %v1892
    %2340 = vmatprep.subr.bf16.mxu0 %v1901
    %2341 = vmatpush1.bf16.msra.mxu0 %v1900
    %2342 = vmatprep.subr.bf16.mxu0 %v1909
    %2343 = vmatpush1.bf16.msra.mxu0 %v1908
    %2344 = vmatprep.subr.bf16.mxu0 %v1917
    %2345 = vmatpush1.bf16.msra.mxu0 %v1916
    %2346 = vmatprep.subr.bf16.mxu0 %v1925
    %2347 = vmatpush1.bf16.msra.mxu0 %v1924
    %2348 = vmatprep.mubr.bf16.mxu0 %v735
    %2349 = vmatmul.mubr.bf16.gmra.mrb[0].mxu0 %v734
    %v2350 = vpop.f32.mrb[0].mxu0
    %v2351 = vadd.f32 %v999, %v2350
    %v2352 = vpop.f32.mrb[0].mxu0
    %v2353 = vadd.f32 %v1003, %v2352
    %v2354 = vpop.f32.mrb[0].mxu0
    %v2355 = vpop.f32.mrb[0].mxu0
    %2356 = vdwg.mxu0
    %2357 = vmatprep.subr.bf16.mxu0 %v1933
    %2358 = vmatpush1.bf16.msra.mxu0 %v1932
    %2359 = vmatprep.subr.bf16.mxu0 %v1941
    %2360 = vmatpush1.bf16.msra.mxu0 %v1940
    %2361 = vmatprep.subr.bf16.mxu0 %v1949
    %2362 = vmatpush1.bf16.msra.mxu0 %v1948
    %2363 = vmatprep.subr.bf16.mxu0 %v1957
    %2364 = vmatpush1.bf16.msra.mxu0 %v1956
    %2365 = vmatprep.subr.bf16.mxu0 %v1965
    %2366 = vmatpush1.bf16.msra.mxu0 %v1964
    %2367 = vmatprep.subr.bf16.mxu0 %v1973
    %2368 = vmatpush1.bf16.msra.mxu0 %v1972
    %2369 = vmatprep.subr.bf16.mxu0 %v1981
    %2370 = vmatpush1.bf16.msra.mxu0 %v1980
    %2371 = vmatprep.subr.bf16.mxu0 %v1989
    %2372 = vmatpush1.bf16.msra.mxu0 %v1988
    %2373 = vmatprep.subr.bf16.mxu0 %v1997
    %2374 = vmatpush1.bf16.msra.mxu0 %v1996
    %2375 = vmatprep.subr.bf16.mxu0 %v2005
    %2376 = vmatpush1.bf16.msra.mxu0 %v2004
    %2377 = vmatprep.subr.bf16.mxu0 %v2013
    %2378 = vmatpush1.bf16.msra.mxu0 %v2012
    %2379 = vmatprep.subr.bf16.mxu0 %v2021
    %2380 = vmatpush1.bf16.msra.mxu0 %v2020
    %2381 = vmatprep.subr.bf16.mxu0 %v2029
    %2382 = vmatpush1.bf16.msra.mxu0 %v2028
    %2383 = vmatprep.subr.bf16.mxu0 %v2037
    %2384 = vmatpush1.bf16.msra.mxu0 %v2036
    %2385 = vmatprep.subr.bf16.mxu0 %v2045
    %2386 = vmatpush1.bf16.msra.mxu0 %v2044
    %2387 = vmatprep.subr.bf16.mxu0 %v2053
    %2388 = vmatpush1.bf16.msra.mxu0 %v2052
    %2389 = vmatprep.mubr.bf16.mxu0 %v737
    %2390 = vmatmul.mubr.bf16.gmra.mrb[0].mxu0 %v736
    %v2391 = vpop.f32.mrb[0].mxu0
    %v2392 = vadd.f32 %v2351, %v2391
    %v2393 = vpop.f32.mrb[0].mxu0
    %v2394 = vadd.f32 %v2353, %v2393
    %v2395 = vpop.f32.mrb[0].mxu0
    %v2396 = vpop.f32.mrb[0].mxu0
    %2397 = vdwg.mxu0
    %2398 = vmatprep.subr.bf16.mxu0 %v1807
    %2399 = vmatpush1.bf16.msra.mxu0 %v1806
    %2400 = vmatprep.subr.bf16.mxu0 %v1815
    %2401 = vmatpush1.bf16.msra.mxu0 %v1814
    %2402 = vmatprep.subr.bf16.mxu0 %v1823
    %2403 = vmatpush1.bf16.msra.mxu0 %v1822
    %2404 = vmatprep.subr.bf16.mxu0 %v1831
    %2405 = vmatpush1.bf16.msra.mxu0 %v1830
    %2406 = vmatprep.subr.bf16.mxu0 %v1839
    %2407 = vmatpush1.bf16.msra.mxu0 %v1838
    %2408 = vmatprep.subr.bf16.mxu0 %v1847
    %2409 = vmatpush1.bf16.msra.mxu0 %v1846
    %2410 = vmatprep.subr.bf16.mxu0 %v1855
    %2411 = vmatpush1.bf16.msra.mxu0 %v1854
    %2412 = vmatprep.subr.bf16.mxu0 %v1863
    %2413 = vmatpush1.bf16.msra.mxu0 %v1862
    %2414 = vmatprep.subr.bf16.mxu0 %v1871
    %2415 = vmatpush1.bf16.msra.mxu0 %v1870
    %2416 = vmatprep.subr.bf16.mxu0 %v1879
    %2417 = vmatpush1.bf16.msra.mxu0 %v1878
    %2418 = vmatprep.subr.bf16.mxu0 %v1887
    %2419 = vmatpush1.bf16.msra.mxu0 %v1886
    %2420 = vmatprep.subr.bf16.mxu0 %v1895
    %2421 = vmatpush1.bf16.msra.mxu0 %v1894
    %2422 = vmatprep.subr.bf16.mxu0 %v1903
    %2423 = vmatpush1.bf16.msra.mxu0 %v1902
    %2424 = vmatprep.subr.bf16.mxu0 %v1911
    %2425 = vmatpush1.bf16.msra.mxu0 %v1910
    %2426 = vmatprep.subr.bf16.mxu0 %v1919
    %2427 = vmatpush1.bf16.msra.mxu0 %v1918
    %2428 = vmatprep.subr.bf16.mxu0 %v1927
    %2429 = vmatpush1.bf16.msra.mxu0 %v1926
    %2430 = vmatprep.mubr.bf16.mxu0 %v735
    %2431 = vmatmul.mubr.bf16.gmra.mrb[0].mxu0 %v734
    %v2432 = vpop.f32.mrb[0].mxu0
    %v2433 = vadd.f32 %v1007, %v2432
    %v2434 = vpop.f32.mrb[0].mxu0
    %v2435 = vadd.f32 %v1011, %v2434
    %v2436 = vpop.f32.mrb[0].mxu0
    %v2437 = vpop.f32.mrb[0].mxu0
    %2438 = vdwg.mxu0
    %2439 = vmatprep.subr.bf16.mxu0 %v1935
    %2440 = vmatpush1.bf16.msra.mxu0 %v1934
    %2441 = vmatprep.subr.bf16.mxu0 %v1943
    %2442 = vmatpush1.bf16.msra.mxu0 %v1942
    %2443 = vmatprep.subr.bf16.mxu0 %v1951
    %2444 = vmatpush1.bf16.msra.mxu0 %v1950
    %2445 = vmatprep.subr.bf16.mxu0 %v1959
    %2446 = vmatpush1.bf16.msra.mxu0 %v1958
    %2447 = vmatprep.subr.bf16.mxu0 %v1967
    %2448 = vmatpush1.bf16.msra.mxu0 %v1966
    %2449 = vmatprep.subr.bf16.mxu0 %v1975
    %2450 = vmatpush1.bf16.msra.mxu0 %v1974
    %2451 = vmatprep.subr.bf16.mxu0 %v1983
    %2452 = vmatpush1.bf16.msra.mxu0 %v1982
    %2453 = vmatprep.subr.bf16.mxu0 %v1991
    %2454 = vmatpush1.bf16.msra.mxu0 %v1990
    %2455 = vmatprep.subr.bf16.mxu0 %v1999
    %2456 = vmatpush1.bf16.msra.mxu0 %v1998
    %2457 = vmatprep.subr.bf16.mxu0 %v2007
    %2458 = vmatpush1.bf16.msra.mxu0 %v2006
    %2459 = vmatprep.subr.bf16.mxu0 %v2015
    %2460 = vmatpush1.bf16.msra.mxu0 %v2014
    %2461 = vmatprep.subr.bf16.mxu0 %v2023
    %2462 = vmatpush1.bf16.msra.mxu0 %v2022
    %2463 = vmatprep.subr.bf16.mxu0 %v2031
    %2464 = vmatpush1.bf16.msra.mxu0 %v2030
    %2465 = vmatprep.subr.bf16.mxu0 %v2039
    %2466 = vmatpush1.bf16.msra.mxu0 %v2038
    %2467 = vmatprep.subr.bf16.mxu0 %v2047
    %2468 = vmatpush1.bf16.msra.mxu0 %v2046
    %2469 = vmatprep.subr.bf16.mxu0 %v2055
    %2470 = vmatpush1.bf16.msra.mxu0 %v2054
    %2471 = vmatprep.mubr.bf16.mxu0 %v737
    %2472 = vmatmul.mubr.bf16.gmra.mrb[0].mxu0 %v736
    %v2473 = vpop.f32.mrb[0].mxu0
    %v2474 = vadd.f32 %v2433, %v2473
    %v2475 = vpop.f32.mrb[0].mxu0
    %v2476 = vadd.f32 %v2435, %v2475
    %v2477 = vpop.f32.mrb[0].mxu0
    %v2478 = vpop.f32.mrb[0].mxu0
    %2479 = vdwg.mxu0
    %2480 = vmatprep.subr.bf16.mxu0 %v1809
    %2481 = vmatpush1.bf16.msra.mxu0 %v1808
    %2482 = vmatprep.subr.bf16.mxu0 %v1817
    %2483 = vmatpush1.bf16.msra.mxu0 %v1816
    %2484 = vmatprep.subr.bf16.mxu0 %v1825
    %2485 = vmatpush1.bf16.msra.mxu0 %v1824
    %2486 = vmatprep.subr.bf16.mxu0 %v1833
    %2487 = vmatpush1.bf16.msra.mxu0 %v1832
    %2488 = vmatprep.subr.bf16.mxu0 %v1841
    %2489 = vmatpush1.bf16.msra.mxu0 %v1840
    %2490 = vmatprep.subr.bf16.mxu0 %v1849
    %2491 = vmatpush1.bf16.msra.mxu0 %v1848
    %2492 = vmatprep.subr.bf16.mxu0 %v1857
    %2493 = vmatpush1.bf16.msra.mxu0 %v1856
    %2494 = vmatprep.subr.bf16.mxu0 %v1865
    %2495 = vmatpush1.bf16.msra.mxu0 %v1864
    %2496 = vmatprep.subr.bf16.mxu0 %v1873
    %2497 = vmatpush1.bf16.msra.mxu0 %v1872
    %2498 = vmatprep.subr.bf16.mxu0 %v1881
    %2499 = vmatpush1.bf16.msra.mxu0 %v1880
    %2500 = vmatprep.subr.bf16.mxu0 %v1889
    %2501 = vmatpush1.bf16.msra.mxu0 %v1888
    %2502 = vmatprep.subr.bf16.mxu0 %v1897
    %2503 = vmatpush1.bf16.msra.mxu0 %v1896
    %2504 = vmatprep.subr.bf16.mxu0 %v1905
    %2505 = vmatpush1.bf16.msra.mxu0 %v1904
    %2506 = vmatprep.subr.bf16.mxu0 %v1913
    %2507 = vmatpush1.bf16.msra.mxu0 %v1912
    %2508 = vmatprep.subr.bf16.mxu0 %v1921
    %2509 = vmatpush1.bf16.msra.mxu0 %v1920
    %2510 = vmatprep.subr.bf16.mxu0 %v1929
    %2511 = vmatpush1.bf16.msra.mxu0 %v1928
    %2512 = vmatprep.mubr.bf16.mxu0 %v735
    %2513 = vmatmul.mubr.bf16.gmra.mrb[0].mxu0 %v734
    %v2514 = vpop.f32.mrb[0].mxu0
    %v2515 = vadd.f32 %v1015, %v2514
    %v2516 = vpop.f32.mrb[0].mxu0
    %v2517 = vadd.f32 %v1019, %v2516
    %v2518 = vpop.f32.mrb[0].mxu0
    %v2519 = vpop.f32.mrb[0].mxu0
    %2520 = vdwg.mxu0
    %2521 = vmatprep.subr.bf16.mxu0 %v1937
    %2522 = vmatpush1.bf16.msra.mxu0 %v1936
    %2523 = vmatprep.subr.bf16.mxu0 %v1945
    %2524 = vmatpush1.bf16.msra.mxu0 %v1944
    %2525 = vmatprep.subr.bf16.mxu0 %v1953
    %2526 = vmatpush1.bf16.msra.mxu0 %v1952
    %2527 = vmatprep.subr.bf16.mxu0 %v1961
    %2528 = vmatpush1.bf16.msra.mxu0 %v1960
    %2529 = vmatprep.subr.bf16.mxu0 %v1969
    %2530 = vmatpush1.bf16.msra.mxu0 %v1968
    %2531 = vmatprep.subr.bf16.mxu0 %v1977
    %2532 = vmatpush1.bf16.msra.mxu0 %v1976
    %2533 = vmatprep.subr.bf16.mxu0 %v1985
    %2534 = vmatpush1.bf16.msra.mxu0 %v1984
    %2535 = vmatprep.subr.bf16.mxu0 %v1993
    %2536 = vmatpush1.bf16.msra.mxu0 %v1992
    %2537 = vmatprep.subr.bf16.mxu0 %v2001
    %2538 = vmatpush1.bf16.msra.mxu0 %v2000
    %2539 = vmatprep.subr.bf16.mxu0 %v2009
    %2540 = vmatpush1.bf16.msra.mxu0 %v2008
    %2541 = vmatprep.subr.bf16.mxu0 %v2017
    %2542 = vmatpush1.bf16.msra.mxu0 %v2016
    %2543 = vmatprep.subr.bf16.mxu0 %v2025
    %2544 = vmatpush1.bf16.msra.mxu0 %v2024
    %2545 = vmatprep.subr.bf16.mxu0 %v2033
    %2546 = vmatpush1.bf16.msra.mxu0 %v2032
    %2547 = vmatprep.subr.bf16.mxu0 %v2041
    %2548 = vmatpush1.bf16.msra.mxu0 %v2040
    %2549 = vmatprep.subr.bf16.mxu0 %v2049
    %2550 = vmatpush1.bf16.msra.mxu0 %v2048
    %2551 = vmatprep.subr.bf16.mxu0 %v2057
    %2552 = vmatpush1.bf16.msra.mxu0 %v2056
    %2553 = vmatprep.mubr.bf16.mxu0 %v737
    %2554 = vmatmul.mubr.bf16.gmra.mrb[0].mxu0 %v736
    %v2555 = vpop.f32.mrb[0].mxu0
    %v2556 = vadd.f32 %v2515, %v2555
    %v2557 = vpop.f32.mrb[0].mxu0
    %v2558 = vadd.f32 %v2517, %v2557
    %v2559 = vpop.f32.mrb[0].mxu0
    %v2560 = vpop.f32.mrb[0].mxu0
    %2561 = vdwg.mxu0
    %2562 = vmatprep.subr.bf16.mxu0 %v1811
    %2563 = vmatpush1.bf16.msra.mxu0 %v1810
    %2564 = vmatprep.subr.bf16.mxu0 %v1819
    %2565 = vmatpush1.bf16.msra.mxu0 %v1818
    %2566 = vmatprep.subr.bf16.mxu0 %v1827
    %2567 = vmatpush1.bf16.msra.mxu0 %v1826
    %2568 = vmatprep.subr.bf16.mxu0 %v1835
    %2569 = vmatpush1.bf16.msra.mxu0 %v1834
    %2570 = vmatprep.subr.bf16.mxu0 %v1843
    %2571 = vmatpush1.bf16.msra.mxu0 %v1842
    %2572 = vmatprep.subr.bf16.mxu0 %v1851
    %2573 = vmatpush1.bf16.msra.mxu0 %v1850
    %2574 = vmatprep.subr.bf16.mxu0 %v1859
    %2575 = vmatpush1.bf16.msra.mxu0 %v1858
    %2576 = vmatprep.subr.bf16.mxu0 %v1867
    %2577 = vmatpush1.bf16.msra.mxu0 %v1866
    %2578 = vmatprep.subr.bf16.mxu0 %v1875
    %2579 = vmatpush1.bf16.msra.mxu0 %v1874
    %2580 = vmatprep.subr.bf16.mxu0 %v1883
    %2581 = vmatpush1.bf16.msra.mxu0 %v1882
    %2582 = vmatprep.subr.bf16.mxu0 %v1891
    %2583 = vmatpush1.bf16.msra.mxu0 %v1890
    %2584 = vmatprep.subr.bf16.mxu0 %v1899
    %2585 = vmatpush1.bf16.msra.mxu0 %v1898
    %2586 = vmatprep.subr.bf16.mxu0 %v1907
    %2587 = vmatpush1.bf16.msra.mxu0 %v1906
    %2588 = vmatprep.subr.bf16.mxu0 %v1915
    %2589 = vmatpush1.bf16.msra.mxu0 %v1914
    %2590 = vmatprep.subr.bf16.mxu0 %v1923
    %2591 = vmatpush1.bf16.msra.mxu0 %v1922
    %2592 = vmatprep.subr.bf16.mxu0 %v1931
    %2593 = vmatpush1.bf16.msra.mxu0 %v1930
    %2594 = vmatprep.mubr.bf16.mxu0 %v735
    %2595 = vmatmul.mubr.bf16.gmra.mrb[0].mxu0 %v734
    %v2596 = vpop.f32.mrb[0].mxu0
    %v2597 = vadd.f32 %v1023, %v2596
    %v2598 = vpop.f32.mrb[0].mxu0
    %v2599 = vadd.f32 %v1027, %v2598
    %v2600 = vpop.f32.mrb[0].mxu0
    %v2601 = vpop.f32.mrb[0].mxu0
    %2602 = vdwg.mxu0
    %2603 = vmatprep.subr.bf16.mxu0 %v1939
    %2604 = vmatpush1.bf16.msra.mxu0 %v1938
    %2605 = vmatprep.subr.bf16.mxu0 %v1947
    %2606 = vmatpush1.bf16.msra.mxu0 %v1946
    %2607 = vmatprep.subr.bf16.mxu0 %v1955
    %2608 = vmatpush1.bf16.msra.mxu0 %v1954
    %2609 = vmatprep.subr.bf16.mxu0 %v1963
    %2610 = vmatpush1.bf16.msra.mxu0 %v1962
    %2611 = vmatprep.subr.bf16.mxu0 %v1971
    %2612 = vmatpush1.bf16.msra.mxu0 %v1970
    %2613 = vmatprep.subr.bf16.mxu0 %v1979
    %2614 = vmatpush1.bf16.msra.mxu0 %v1978
    %2615 = vmatprep.subr.bf16.mxu0 %v1987
    %2616 = vmatpush1.bf16.msra.mxu0 %v1986
    %2617 = vmatprep.subr.bf16.mxu0 %v1995
    %2618 = vmatpush1.bf16.msra.mxu0 %v1994
    %2619 = vmatprep.subr.bf16.mxu0 %v2003
    %2620 = vmatpush1.bf16.msra.mxu0 %v2002
    %2621 = vmatprep.subr.bf16.mxu0 %v2011
    %2622 = vmatpush1.bf16.msra.mxu0 %v2010
    %2623 = vmatprep.subr.bf16.mxu0 %v2019
    %2624 = vmatpush1.bf16.msra.mxu0 %v2018
    %2625 = vmatprep.subr.bf16.mxu0 %v2027
    %2626 = vmatpush1.bf16.msra.mxu0 %v2026
    %2627 = vmatprep.subr.bf16.mxu0 %v2035
    %2628 = vmatpush1.bf16.msra.mxu0 %v2034
    %2629 = vmatprep.subr.bf16.mxu0 %v2043
    %2630 = vmatpush1.bf16.msra.mxu0 %v2042
    %2631 = vmatprep.subr.bf16.mxu0 %v2051
    %2632 = vmatpush1.bf16.msra.mxu0 %v2050
    %2633 = vmatprep.subr.bf16.mxu0 %v2059
    %2634 = vmatpush1.bf16.msra.mxu0 %v2058
    %2635 = vmatprep.mubr.bf16.mxu0 %v737
    %2636 = vmatmul.mubr.bf16.gmra.mrb[0].mxu0 %v736
    %v2637 = vpop.f32.mrb[0].mxu0
    %v2638 = vadd.f32 %v2597, %v2637
    %v2639 = vpop.f32.mrb[0].mxu0
    %v2640 = vadd.f32 %v2599, %v2639
    %v2641 = vpop.f32.mrb[0].mxu0
    %v2642 = vpop.f32.mrb[0].mxu0
    %2643 = vdwg.mxu0
    %v2644 = vmax.f32 %v2392, 0.0
    %v2645 = vmax.f32 %v2394, 0.0
    %v2646 = vmax.f32 %v2474, 0.0
    %v2647 = vmax.f32 %v2476, 0.0
    %v2648 = vmax.f32 %v2556, 0.0
    %v2649 = vmax.f32 %v2558, 0.0
    %v2650 = vmax.f32 %v2638, 0.0
    %v2651 = vmax.f32 %v2640, 0.0
    %v2652 = vpack.c.bf16 %v2644, %v2644
    %v2653 = vpack.c.bf16 %v2645, %v2645
    %v2654 = vpack.c.bf16 %v2646, %v2646
    %v2655 = vpack.c.bf16 %v2647, %v2647
    %v2656 = vpack.c.bf16 %v2648, %v2648
    %v2657 = vpack.c.bf16 %v2649, %v2649
    %v2658 = vpack.c.bf16 %v2650, %v2650
    %v2659 = vpack.c.bf16 %v2651, %v2651
    %v2660 = vld [vmem:[#allocation7] sm:$0xff]
    %v2661 = vld [vmem:[#allocation7 + $0x8] sm:$0xff]
    %v2662 = vld [vmem:[#allocation7 + $0x10] sm:$0xff]
    %v2663 = vld [vmem:[#allocation7 + $0x18] sm:$0xff]
    %v2664 = vld [vmem:[#allocation7 + $0x20] sm:$0xff]
    %v2665 = vld [vmem:[#allocation7 + $0x28] sm:$0xff]
    %v2666 = vld [vmem:[#allocation7 + $0x30] sm:$0xff]
    %v2667 = vld [vmem:[#allocation7 + $0x38] sm:$0xff]
    %v2668 = vld [vmem:[#allocation7 + $0x40] sm:$0xff]
    %v2669 = vld [vmem:[#allocation7 + $0x48] sm:$0xff]
    %v2670 = vld [vmem:[#allocation7 + $0x50] sm:$0xff]
    %v2671 = vld [vmem:[#allocation7 + $0x58] sm:$0xff]
    %v2672 = vld [vmem:[#allocation7 + $0x60] sm:$0xff]
    %v2673 = vld [vmem:[#allocation7 + $0x68] sm:$0xff]
    %v2674 = vld [vmem:[#allocation7 + $0x70] sm:$0xff]
    %v2675 = vld [vmem:[#allocation7 + $0x78] sm:$0xff]
    %v2676 = vld [vmem:[#allocation7 + $0x80] sm:$0xff]
    %v2677 = vld [vmem:[#allocation7 + $0x88] sm:$0xff]
    %v2678 = vld [vmem:[#allocation7 + $0x90] sm:$0xff]
    %v2679 = vld [vmem:[#allocation7 + $0x98] sm:$0xff]
    %v2680 = vld [vmem:[#allocation7 + $0xa0] sm:$0xff]
    %v2681 = vld [vmem:[#allocation7 + $0xa8] sm:$0xff]
    %v2682 = vld [vmem:[#allocation7 + $0xb0] sm:$0xff]
    %v2683 = vld [vmem:[#allocation7 + $0xb8] sm:$0xff]
    %v2684 = vld [vmem:[#allocation7 + $0xc0] sm:$0xff]
    %v2685 = vld [vmem:[#allocation7 + $0xc8] sm:$0xff]
    %v2686 = vld [vmem:[#allocation7 + $0xd0] sm:$0xff]
    %v2687 = vld [vmem:[#allocation7 + $0xd8] sm:$0xff]
    %v2688 = vld [vmem:[#allocation7 + $0xe0] sm:$0xff]
    %v2689 = vld [vmem:[#allocation7 + $0xe8] sm:$0xff]
    %v2690 = vld [vmem:[#allocation7 + $0xf0] sm:$0xff]
    %v2691 = vld [vmem:[#allocation7 + $0xf8] sm:$0xff]
    %v2692 = vld [vmem:[#allocation7 + $0x100] sm:$0xff]
    %v2693 = vld [vmem:[#allocation7 + $0x108] sm:$0xff]
    %v2694 = vld [vmem:[#allocation7 + $0x110] sm:$0xff]
    %v2695 = vld [vmem:[#allocation7 + $0x118] sm:$0xff]
    %v2696 = vld [vmem:[#allocation7 + $0x120] sm:$0xff]
    %v2697 = vld [vmem:[#allocation7 + $0x128] sm:$0xff]
    %v2698 = vld [vmem:[#allocation7 + $0x130] sm:$0xff]
    %v2699 = vld [vmem:[#allocation7 + $0x138] sm:$0xff]
    %v2700 = vld [vmem:[#allocation7 + $0x140] sm:$0xff]
    %v2701 = vld [vmem:[#allocation7 + $0x148] sm:$0xff]
    %v2702 = vld [vmem:[#allocation7 + $0x150] sm:$0xff]
    %v2703 = vld [vmem:[#allocation7 + $0x158] sm:$0xff]
    %v2704 = vld [vmem:[#allocation7 + $0x160] sm:$0xff]
    %v2705 = vld [vmem:[#allocation7 + $0x168] sm:$0xff]
    %v2706 = vld [vmem:[#allocation7 + $0x170] sm:$0xff]
    %v2707 = vld [vmem:[#allocation7 + $0x178] sm:$0xff]
    %v2708 = vld [vmem:[#allocation7 + $0x180] sm:$0xff]
    %v2709 = vld [vmem:[#allocation7 + $0x188] sm:$0xff]
    %v2710 = vld [vmem:[#allocation7 + $0x190] sm:$0xff]
    %v2711 = vld [vmem:[#allocation7 + $0x198] sm:$0xff]
    %v2712 = vld [vmem:[#allocation7 + $0x1a0] sm:$0xff]
    %v2713 = vld [vmem:[#allocation7 + $0x1a8] sm:$0xff]
    %v2714 = vld [vmem:[#allocation7 + $0x1b0] sm:$0xff]
    %v2715 = vld [vmem:[#allocation7 + $0x1b8] sm:$0xff]
    %v2716 = vld [vmem:[#allocation7 + $0x1c0] sm:$0xff]
    %v2717 = vld [vmem:[#allocation7 + $0x1c8] sm:$0xff]
    %v2718 = vld [vmem:[#allocation7 + $0x1d0] sm:$0xff]
    %v2719 = vld [vmem:[#allocation7 + $0x1d8] sm:$0xff]
    %v2720 = vld [vmem:[#allocation7 + $0x1e0] sm:$0xff]
    %v2721 = vld [vmem:[#allocation7 + $0x1e8] sm:$0xff]
    %v2722 = vld [vmem:[#allocation7 + $0x1f0] sm:$0xff]
    %v2723 = vld [vmem:[#allocation7 + $0x1f8] sm:$0xff]
    %v2724 = vld [vmem:[#allocation7 + $0x200] sm:$0xff]
    %v2725 = vld [vmem:[#allocation7 + $0x208] sm:$0xff]
    %v2726 = vld [vmem:[#allocation7 + $0x210] sm:$0xff]
    %v2727 = vld [vmem:[#allocation7 + $0x218] sm:$0xff]
    %v2728 = vld [vmem:[#allocation7 + $0x220] sm:$0xff]
    %v2729 = vld [vmem:[#allocation7 + $0x228] sm:$0xff]
    %v2730 = vld [vmem:[#allocation7 + $0x230] sm:$0xff]
    %v2731 = vld [vmem:[#allocation7 + $0x238] sm:$0xff]
    %v2732 = vld [vmem:[#allocation7 + $0x240] sm:$0xff]
    %v2733 = vld [vmem:[#allocation7 + $0x248] sm:$0xff]
    %v2734 = vld [vmem:[#allocation7 + $0x250] sm:$0xff]
    %v2735 = vld [vmem:[#allocation7 + $0x258] sm:$0xff]
    %v2736 = vld [vmem:[#allocation7 + $0x260] sm:$0xff]
    %v2737 = vld [vmem:[#allocation7 + $0x268] sm:$0xff]
    %v2738 = vld [vmem:[#allocation7 + $0x270] sm:$0xff]
    %v2739 = vld [vmem:[#allocation7 + $0x278] sm:$0xff]
    %v2740 = vld [vmem:[#allocation7 + $0x280] sm:$0xff]
    %v2741 = vld [vmem:[#allocation7 + $0x288] sm:$0xff]
    %v2742 = vld [vmem:[#allocation7 + $0x290] sm:$0xff]
    %v2743 = vld [vmem:[#allocation7 + $0x298] sm:$0xff]
    %v2744 = vld [vmem:[#allocation7 + $0x2a0] sm:$0xff]
    %v2745 = vld [vmem:[#allocation7 + $0x2a8] sm:$0xff]
    %v2746 = vld [vmem:[#allocation7 + $0x2b0] sm:$0xff]
    %v2747 = vld [vmem:[#allocation7 + $0x2b8] sm:$0xff]
    %v2748 = vld [vmem:[#allocation7 + $0x2c0] sm:$0xff]
    %v2749 = vld [vmem:[#allocation7 + $0x2c8] sm:$0xff]
    %v2750 = vld [vmem:[#allocation7 + $0x2d0] sm:$0xff]
    %v2751 = vld [vmem:[#allocation7 + $0x2d8] sm:$0xff]
    %v2752 = vld [vmem:[#allocation7 + $0x2e0] sm:$0xff]
    %v2753 = vld [vmem:[#allocation7 + $0x2e8] sm:$0xff]
    %v2754 = vld [vmem:[#allocation7 + $0x2f0] sm:$0xff]
    %v2755 = vld [vmem:[#allocation7 + $0x2f8] sm:$0xff]
    %v2756 = vld [vmem:[#allocation7 + $0x300] sm:$0xff]
    %v2757 = vld [vmem:[#allocation7 + $0x308] sm:$0xff]
    %v2758 = vld [vmem:[#allocation7 + $0x310] sm:$0xff]
    %v2759 = vld [vmem:[#allocation7 + $0x318] sm:$0xff]
    %v2760 = vld [vmem:[#allocation7 + $0x320] sm:$0xff]
    %v2761 = vld [vmem:[#allocation7 + $0x328] sm:$0xff]
    %v2762 = vld [vmem:[#allocation7 + $0x330] sm:$0xff]
    %v2763 = vld [vmem:[#allocation7 + $0x338] sm:$0xff]
    %v2764 = vld [vmem:[#allocation7 + $0x340] sm:$0xff]
    %v2765 = vld [vmem:[#allocation7 + $0x348] sm:$0xff]
    %v2766 = vld [vmem:[#allocation7 + $0x350] sm:$0xff]
    %v2767 = vld [vmem:[#allocation7 + $0x358] sm:$0xff]
    %v2768 = vld [vmem:[#allocation7 + $0x360] sm:$0xff]
    %v2769 = vld [vmem:[#allocation7 + $0x368] sm:$0xff]
    %v2770 = vld [vmem:[#allocation7 + $0x370] sm:$0xff]
    %v2771 = vld [vmem:[#allocation7 + $0x378] sm:$0xff]
    %v2772 = vld [vmem:[#allocation7 + $0x380] sm:$0xff]
    %v2773 = vld [vmem:[#allocation7 + $0x388] sm:$0xff]
    %v2774 = vld [vmem:[#allocation7 + $0x390] sm:$0xff]
    %v2775 = vld [vmem:[#allocation7 + $0x398] sm:$0xff]
    %v2776 = vld [vmem:[#allocation7 + $0x3a0] sm:$0xff]
    %v2777 = vld [vmem:[#allocation7 + $0x3a8] sm:$0xff]
    %v2778 = vld [vmem:[#allocation7 + $0x3b0] sm:$0xff]
    %v2779 = vld [vmem:[#allocation7 + $0x3b8] sm:$0xff]
    %v2780 = vld [vmem:[#allocation7 + $0x3c0] sm:$0xff]
    %v2781 = vld [vmem:[#allocation7 + $0x3c8] sm:$0xff]
    %v2782 = vld [vmem:[#allocation7 + $0x3d0] sm:$0xff]
    %v2783 = vld [vmem:[#allocation7 + $0x3d8] sm:$0xff]
    %v2784 = vld [vmem:[#allocation7 + $0x3e0] sm:$0xff]
    %v2785 = vld [vmem:[#allocation7 + $0x3e8] sm:$0xff]
    %v2786 = vld [vmem:[#allocation7 + $0x3f0] sm:$0xff]
    %v2787 = vld [vmem:[#allocation7 + $0x3f8] sm:$0xff]
    %v2788 = vld [vmem:[%s8] sm:$0x3]
    %v2790 = vlaneseq
    %v2791 = vshrl.u32 %v2790, 7
    %v2792 = vsub.s32 0, %v2791
    %v2793 = vrot.slane %v2788, %v2792
    %v2794 = vlaneseq
    %v2795 = vshrl.u32 %v2794, 7
    %v2796 = vsub.s32 1, %v2795
    %v2797 = vrot.slane %v2788, %v2796
    %v2928 = vunpack.c.l.b16 %v2660
    %v2929 = vunpack.c.h.b16 %v2660
    %v2930 = vunpack.c.l.b16 %v2661
    %v2931 = vunpack.c.h.b16 %v2661
    %v2932 = vunpack.c.l.b16 %v2662
    %v2933 = vunpack.c.h.b16 %v2662
    %v2934 = vunpack.c.l.b16 %v2663
    %v2935 = vunpack.c.h.b16 %v2663
    %v2936 = vunpack.c.l.b16 %v2664
    %v2937 = vunpack.c.h.b16 %v2664
    %v2938 = vunpack.c.l.b16 %v2665
    %v2939 = vunpack.c.h.b16 %v2665
    %v2940 = vunpack.c.l.b16 %v2666
    %v2941 = vunpack.c.h.b16 %v2666
    %v2942 = vunpack.c.l.b16 %v2667
    %v2943 = vunpack.c.h.b16 %v2667
    %v2944 = vunpack.c.l.b16 %v2668
    %v2945 = vunpack.c.h.b16 %v2668
    %v2946 = vunpack.c.l.b16 %v2669
    %v2947 = vunpack.c.h.b16 %v2669
    %v2948 = vunpack.c.l.b16 %v2670
    %v2949 = vunpack.c.h.b16 %v2670
    %v2950 = vunpack.c.l.b16 %v2671
    %v2951 = vunpack.c.h.b16 %v2671
    %v2952 = vunpack.c.l.b16 %v2672
    %v2953 = vunpack.c.h.b16 %v2672
    %v2954 = vunpack.c.l.b16 %v2673
    %v2955 = vunpack.c.h.b16 %v2673
    %v2956 = vunpack.c.l.b16 %v2674
    %v2957 = vunpack.c.h.b16 %v2674
    %v2958 = vunpack.c.l.b16 %v2675
    %v2959 = vunpack.c.h.b16 %v2675
    %v2960 = vunpack.c.l.b16 %v2676
    %v2961 = vunpack.c.h.b16 %v2676
    %v2962 = vunpack.c.l.b16 %v2677
    %v2963 = vunpack.c.h.b16 %v2677
    %v2964 = vunpack.c.l.b16 %v2678
    %v2965 = vunpack.c.h.b16 %v2678
    %v2966 = vunpack.c.l.b16 %v2679
    %v2967 = vunpack.c.h.b16 %v2679
    %v2968 = vunpack.c.l.b16 %v2680
    %v2969 = vunpack.c.h.b16 %v2680
    %v2970 = vunpack.c.l.b16 %v2681
    %v2971 = vunpack.c.h.b16 %v2681
    %v2972 = vunpack.c.l.b16 %v2682
    %v2973 = vunpack.c.h.b16 %v2682
    %v2974 = vunpack.c.l.b16 %v2683
    %v2975 = vunpack.c.h.b16 %v2683
    %v2976 = vunpack.c.l.b16 %v2684
    %v2977 = vunpack.c.h.b16 %v2684
    %v2978 = vunpack.c.l.b16 %v2685
    %v2979 = vunpack.c.h.b16 %v2685
    %v2980 = vunpack.c.l.b16 %v2686
    %v2981 = vunpack.c.h.b16 %v2686
    %v2982 = vunpack.c.l.b16 %v2687
    %v2983 = vunpack.c.h.b16 %v2687
    %v2984 = vunpack.c.l.b16 %v2688
    %v2985 = vunpack.c.h.b16 %v2688
    %v2986 = vunpack.c.l.b16 %v2689
    %v2987 = vunpack.c.h.b16 %v2689
    %v2988 = vunpack.c.l.b16 %v2690
    %v2989 = vunpack.c.h.b16 %v2690
    %v2990 = vunpack.c.l.b16 %v2691
    %v2991 = vunpack.c.h.b16 %v2691
    %v2992 = vunpack.c.l.b16 %v2692
    %v2993 = vunpack.c.h.b16 %v2692
    %v2994 = vunpack.c.l.b16 %v2693
    %v2995 = vunpack.c.h.b16 %v2693
    %v2996 = vunpack.c.l.b16 %v2694
    %v2997 = vunpack.c.h.b16 %v2694
    %v2998 = vunpack.c.l.b16 %v2695
    %v2999 = vunpack.c.h.b16 %v2695
    %v3000 = vunpack.c.l.b16 %v2696
    %v3001 = vunpack.c.h.b16 %v2696
    %v3002 = vunpack.c.l.b16 %v2697
    %v3003 = vunpack.c.h.b16 %v2697
    %v3004 = vunpack.c.l.b16 %v2698
    %v3005 = vunpack.c.h.b16 %v2698
    %v3006 = vunpack.c.l.b16 %v2699
    %v3007 = vunpack.c.h.b16 %v2699
    %v3008 = vunpack.c.l.b16 %v2700
    %v3009 = vunpack.c.h.b16 %v2700
    %v3010 = vunpack.c.l.b16 %v2701
    %v3011 = vunpack.c.h.b16 %v2701
    %v3012 = vunpack.c.l.b16 %v2702
    %v3013 = vunpack.c.h.b16 %v2702
    %v3014 = vunpack.c.l.b16 %v2703
    %v3015 = vunpack.c.h.b16 %v2703
    %v3016 = vunpack.c.l.b16 %v2704
    %v3017 = vunpack.c.h.b16 %v2704
    %v3018 = vunpack.c.l.b16 %v2705
    %v3019 = vunpack.c.h.b16 %v2705
    %v3020 = vunpack.c.l.b16 %v2706
    %v3021 = vunpack.c.h.b16 %v2706
    %v3022 = vunpack.c.l.b16 %v2707
    %v3023 = vunpack.c.h.b16 %v2707
    %v3024 = vunpack.c.l.b16 %v2708
    %v3025 = vunpack.c.h.b16 %v2708
    %v3026 = vunpack.c.l.b16 %v2709
    %v3027 = vunpack.c.h.b16 %v2709
    %v3028 = vunpack.c.l.b16 %v2710
    %v3029 = vunpack.c.h.b16 %v2710
    %v3030 = vunpack.c.l.b16 %v2711
    %v3031 = vunpack.c.h.b16 %v2711
    %v3032 = vunpack.c.l.b16 %v2712
    %v3033 = vunpack.c.h.b16 %v2712
    %v3034 = vunpack.c.l.b16 %v2713
    %v3035 = vunpack.c.h.b16 %v2713
    %v3036 = vunpack.c.l.b16 %v2714
    %v3037 = vunpack.c.h.b16 %v2714
    %v3038 = vunpack.c.l.b16 %v2715
    %v3039 = vunpack.c.h.b16 %v2715
    %v3040 = vunpack.c.l.b16 %v2716
    %v3041 = vunpack.c.h.b16 %v2716
    %v3042 = vunpack.c.l.b16 %v2717
    %v3043 = vunpack.c.h.b16 %v2717
    %v3044 = vunpack.c.l.b16 %v2718
    %v3045 = vunpack.c.h.b16 %v2718
    %v3046 = vunpack.c.l.b16 %v2719
    %v3047 = vunpack.c.h.b16 %v2719
    %v3048 = vunpack.c.l.b16 %v2720
    %v3049 = vunpack.c.h.b16 %v2720
    %v3050 = vunpack.c.l.b16 %v2721
    %v3051 = vunpack.c.h.b16 %v2721
    %v3052 = vunpack.c.l.b16 %v2722
    %v3053 = vunpack.c.h.b16 %v2722
    %v3054 = vunpack.c.l.b16 %v2723
    %v3055 = vunpack.c.h.b16 %v2723
    %v3056 = vunpack.c.l.b16 %v2724
    %v3057 = vunpack.c.h.b16 %v2724
    %v3058 = vunpack.c.l.b16 %v2725
    %v3059 = vunpack.c.h.b16 %v2725
    %v3060 = vunpack.c.l.b16 %v2726
    %v3061 = vunpack.c.h.b16 %v2726
    %v3062 = vunpack.c.l.b16 %v2727
    %v3063 = vunpack.c.h.b16 %v2727
    %v3064 = vunpack.c.l.b16 %v2728
    %v3065 = vunpack.c.h.b16 %v2728
    %v3066 = vunpack.c.l.b16 %v2729
    %v3067 = vunpack.c.h.b16 %v2729
    %v3068 = vunpack.c.l.b16 %v2730
    %v3069 = vunpack.c.h.b16 %v2730
    %v3070 = vunpack.c.l.b16 %v2731
    %v3071 = vunpack.c.h.b16 %v2731
    %v3072 = vunpack.c.l.b16 %v2732
    %v3073 = vunpack.c.h.b16 %v2732
    %v3074 = vunpack.c.l.b16 %v2733
    %v3075 = vunpack.c.h.b16 %v2733
    %v3076 = vunpack.c.l.b16 %v2734
    %v3077 = vunpack.c.h.b16 %v2734
    %v3078 = vunpack.c.l.b16 %v2735
    %v3079 = vunpack.c.h.b16 %v2735
    %v3080 = vunpack.c.l.b16 %v2736
    %v3081 = vunpack.c.h.b16 %v2736
    %v3082 = vunpack.c.l.b16 %v2737
    %v3083 = vunpack.c.h.b16 %v2737
    %v3084 = vunpack.c.l.b16 %v2738
    %v3085 = vunpack.c.h.b16 %v2738
    %v3086 = vunpack.c.l.b16 %v2739
    %v3087 = vunpack.c.h.b16 %v2739
    %v3088 = vunpack.c.l.b16 %v2740
    %v3089 = vunpack.c.h.b16 %v2740
    %v3090 = vunpack.c.l.b16 %v2741
    %v3091 = vunpack.c.h.b16 %v2741
    %v3092 = vunpack.c.l.b16 %v2742
    %v3093 = vunpack.c.h.b16 %v2742
    %v3094 = vunpack.c.l.b16 %v2743
    %v3095 = vunpack.c.h.b16 %v2743
    %v3096 = vunpack.c.l.b16 %v2744
    %v3097 = vunpack.c.h.b16 %v2744
    %v3098 = vunpack.c.l.b16 %v2745
    %v3099 = vunpack.c.h.b16 %v2745
    %v3100 = vunpack.c.l.b16 %v2746
    %v3101 = vunpack.c.h.b16 %v2746
    %v3102 = vunpack.c.l.b16 %v2747
    %v3103 = vunpack.c.h.b16 %v2747
    %v3104 = vunpack.c.l.b16 %v2748
    %v3105 = vunpack.c.h.b16 %v2748
    %v3106 = vunpack.c.l.b16 %v2749
    %v3107 = vunpack.c.h.b16 %v2749
    %v3108 = vunpack.c.l.b16 %v2750
    %v3109 = vunpack.c.h.b16 %v2750
    %v3110 = vunpack.c.l.b16 %v2751
    %v3111 = vunpack.c.h.b16 %v2751
    %v3112 = vunpack.c.l.b16 %v2752
    %v3113 = vunpack.c.h.b16 %v2752
    %v3114 = vunpack.c.l.b16 %v2753
    %v3115 = vunpack.c.h.b16 %v2753
    %v3116 = vunpack.c.l.b16 %v2754
    %v3117 = vunpack.c.h.b16 %v2754
    %v3118 = vunpack.c.l.b16 %v2755
    %v3119 = vunpack.c.h.b16 %v2755
    %v3120 = vunpack.c.l.b16 %v2756
    %v3121 = vunpack.c.h.b16 %v2756
    %v3122 = vunpack.c.l.b16 %v2757
    %v3123 = vunpack.c.h.b16 %v2757
    %v3124 = vunpack.c.l.b16 %v2758
    %v3125 = vunpack.c.h.b16 %v2758
    %v3126 = vunpack.c.l.b16 %v2759
    %v3127 = vunpack.c.h.b16 %v2759
    %v3128 = vunpack.c.l.b16 %v2760
    %v3129 = vunpack.c.h.b16 %v2760
    %v3130 = vunpack.c.l.b16 %v2761
    %v3131 = vunpack.c.h.b16 %v2761
    %v3132 = vunpack.c.l.b16 %v2762
    %v3133 = vunpack.c.h.b16 %v2762
    %v3134 = vunpack.c.l.b16 %v2763
    %v3135 = vunpack.c.h.b16 %v2763
    %v3136 = vunpack.c.l.b16 %v2764
    %v3137 = vunpack.c.h.b16 %v2764
    %v3138 = vunpack.c.l.b16 %v2765
    %v3139 = vunpack.c.h.b16 %v2765
    %v3140 = vunpack.c.l.b16 %v2766
    %v3141 = vunpack.c.h.b16 %v2766
    %v3142 = vunpack.c.l.b16 %v2767
    %v3143 = vunpack.c.h.b16 %v2767
    %v3144 = vunpack.c.l.b16 %v2768
    %v3145 = vunpack.c.h.b16 %v2768
    %v3146 = vunpack.c.l.b16 %v2769
    %v3147 = vunpack.c.h.b16 %v2769
    %v3148 = vunpack.c.l.b16 %v2770
    %v3149 = vunpack.c.h.b16 %v2770
    %v3150 = vunpack.c.l.b16 %v2771
    %v3151 = vunpack.c.h.b16 %v2771
    %v3152 = vunpack.c.l.b16 %v2772
    %v3153 = vunpack.c.h.b16 %v2772
    %v3154 = vunpack.c.l.b16 %v2773
    %v3155 = vunpack.c.h.b16 %v2773
    %v3156 = vunpack.c.l.b16 %v2774
    %v3157 = vunpack.c.h.b16 %v2774
    %v3158 = vunpack.c.l.b16 %v2775
    %v3159 = vunpack.c.h.b16 %v2775
    %v3160 = vunpack.c.l.b16 %v2776
    %v3161 = vunpack.c.h.b16 %v2776
    %v3162 = vunpack.c.l.b16 %v2777
    %v3163 = vunpack.c.h.b16 %v2777
    %v3164 = vunpack.c.l.b16 %v2778
    %v3165 = vunpack.c.h.b16 %v2778
    %v3166 = vunpack.c.l.b16 %v2779
    %v3167 = vunpack.c.h.b16 %v2779
    %v3168 = vunpack.c.l.b16 %v2780
    %v3169 = vunpack.c.h.b16 %v2780
    %v3170 = vunpack.c.l.b16 %v2781
    %v3171 = vunpack.c.h.b16 %v2781
    %v3172 = vunpack.c.l.b16 %v2782
    %v3173 = vunpack.c.h.b16 %v2782
    %v3174 = vunpack.c.l.b16 %v2783
    %v3175 = vunpack.c.h.b16 %v2783
    %v3176 = vunpack.c.l.b16 %v2784
    %v3177 = vunpack.c.h.b16 %v2784
    %v3178 = vunpack.c.l.b16 %v2785
    %v3179 = vunpack.c.h.b16 %v2785
    %v3180 = vunpack.c.l.b16 %v2786
    %v3181 = vunpack.c.h.b16 %v2786
    %v3182 = vunpack.c.l.b16 %v2787
    %v3183 = vunpack.c.h.b16 %v2787
    %v3184 = vpack.c.b16 %v2930, %v2928
    %v3185 = vpack.c.b16 %v2931, %v2929
    %v3186 = vpack.c.b16 %v2934, %v2932
    %v3187 = vpack.c.b16 %v2935, %v2933
    %v3188 = vpack.c.b16 %v2938, %v2936
    %v3189 = vpack.c.b16 %v2939, %v2937
    %v3190 = vpack.c.b16 %v2942, %v2940
    %v3191 = vpack.c.b16 %v2943, %v2941
    %v3192 = vpack.c.b16 %v2946, %v2944
    %v3193 = vpack.c.b16 %v2947, %v2945
    %v3194 = vpack.c.b16 %v2950, %v2948
    %v3195 = vpack.c.b16 %v2951, %v2949
    %v3196 = vpack.c.b16 %v2954, %v2952
    %v3197 = vpack.c.b16 %v2955, %v2953
    %v3198 = vpack.c.b16 %v2958, %v2956
    %v3199 = vpack.c.b16 %v2959, %v2957
    %v3200 = vpack.c.b16 %v2962, %v2960
    %v3201 = vpack.c.b16 %v2963, %v2961
    %v3202 = vpack.c.b16 %v2966, %v2964
    %v3203 = vpack.c.b16 %v2967, %v2965
    %v3204 = vpack.c.b16 %v2970, %v2968
    %v3205 = vpack.c.b16 %v2971, %v2969
    %v3206 = vpack.c.b16 %v2974, %v2972
    %v3207 = vpack.c.b16 %v2975, %v2973
    %v3208 = vpack.c.b16 %v2978, %v2976
    %v3209 = vpack.c.b16 %v2979, %v2977
    %v3210 = vpack.c.b16 %v2982, %v2980
    %v3211 = vpack.c.b16 %v2983, %v2981
    %v3212 = vpack.c.b16 %v2986, %v2984
    %v3213 = vpack.c.b16 %v2987, %v2985
    %v3214 = vpack.c.b16 %v2990, %v2988
    %v3215 = vpack.c.b16 %v2991, %v2989
    %v3216 = vpack.c.b16 %v2994, %v2992
    %v3217 = vpack.c.b16 %v2995, %v2993
    %v3218 = vpack.c.b16 %v2998, %v2996
    %v3219 = vpack.c.b16 %v2999, %v2997
    %v3220 = vpack.c.b16 %v3002, %v3000
    %v3221 = vpack.c.b16 %v3003, %v3001
    %v3222 = vpack.c.b16 %v3006, %v3004
    %v3223 = vpack.c.b16 %v3007, %v3005
    %v3224 = vpack.c.b16 %v3010, %v3008
    %v3225 = vpack.c.b16 %v3011, %v3009
    %v3226 = vpack.c.b16 %v3014, %v3012
    %v3227 = vpack.c.b16 %v3015, %v3013
    %v3228 = vpack.c.b16 %v3018, %v3016
    %v3229 = vpack.c.b16 %v3019, %v3017
    %v3230 = vpack.c.b16 %v3022, %v3020
    %v3231 = vpack.c.b16 %v3023, %v3021
    %v3232 = vpack.c.b16 %v3026, %v3024
    %v3233 = vpack.c.b16 %v3027, %v3025
    %v3234 = vpack.c.b16 %v3030, %v3028
    %v3235 = vpack.c.b16 %v3031, %v3029
    %v3236 = vpack.c.b16 %v3034, %v3032
    %v3237 = vpack.c.b16 %v3035, %v3033
    %v3238 = vpack.c.b16 %v3038, %v3036
    %v3239 = vpack.c.b16 %v3039, %v3037
    %v3240 = vpack.c.b16 %v3042, %v3040
    %v3241 = vpack.c.b16 %v3043, %v3041
    %v3242 = vpack.c.b16 %v3046, %v3044
    %v3243 = vpack.c.b16 %v3047, %v3045
    %v3244 = vpack.c.b16 %v3050, %v3048
    %v3245 = vpack.c.b16 %v3051, %v3049
    %v3246 = vpack.c.b16 %v3054, %v3052
    %v3247 = vpack.c.b16 %v3055, %v3053
    %v3248 = vpack.c.b16 %v3058, %v3056
    %v3249 = vpack.c.b16 %v3059, %v3057
    %v3250 = vpack.c.b16 %v3062, %v3060
    %v3251 = vpack.c.b16 %v3063, %v3061
    %v3252 = vpack.c.b16 %v3066, %v3064
    %v3253 = vpack.c.b16 %v3067, %v3065
    %v3254 = vpack.c.b16 %v3070, %v3068
    %v3255 = vpack.c.b16 %v3071, %v3069
    %v3256 = vpack.c.b16 %v3074, %v3072
    %v3257 = vpack.c.b16 %v3075, %v3073
    %v3258 = vpack.c.b16 %v3078, %v3076
    %v3259 = vpack.c.b16 %v3079, %v3077
    %v3260 = vpack.c.b16 %v3082, %v3080
    %v3261 = vpack.c.b16 %v3083, %v3081
    %v3262 = vpack.c.b16 %v3086, %v3084
    %v3263 = vpack.c.b16 %v3087, %v3085
    %v3264 = vpack.c.b16 %v3090, %v3088
    %v3265 = vpack.c.b16 %v3091, %v3089
    %v3266 = vpack.c.b16 %v3094, %v3092
    %v3267 = vpack.c.b16 %v3095, %v3093
    %v3268 = vpack.c.b16 %v3098, %v3096
    %v3269 = vpack.c.b16 %v3099, %v3097
    %v3270 = vpack.c.b16 %v3102, %v3100
    %v3271 = vpack.c.b16 %v3103, %v3101
    %v3272 = vpack.c.b16 %v3106, %v3104
    %v3273 = vpack.c.b16 %v3107, %v3105
    %v3274 = vpack.c.b16 %v3110, %v3108
    %v3275 = vpack.c.b16 %v3111, %v3109
    %v3276 = vpack.c.b16 %v3114, %v3112
    %v3277 = vpack.c.b16 %v3115, %v3113
    %v3278 = vpack.c.b16 %v3118, %v3116
    %v3279 = vpack.c.b16 %v3119, %v3117
    %v3280 = vpack.c.b16 %v3122, %v3120
    %v3281 = vpack.c.b16 %v3123, %v3121
    %v3282 = vpack.c.b16 %v3126, %v3124
    %v3283 = vpack.c.b16 %v3127, %v3125
    %v3284 = vpack.c.b16 %v3130, %v3128
    %v3285 = vpack.c.b16 %v3131, %v3129
    %v3286 = vpack.c.b16 %v3134, %v3132
    %v3287 = vpack.c.b16 %v3135, %v3133
    %v3288 = vpack.c.b16 %v3138, %v3136
    %v3289 = vpack.c.b16 %v3139, %v3137
    %v3290 = vpack.c.b16 %v3142, %v3140
    %v3291 = vpack.c.b16 %v3143, %v3141
    %v3292 = vpack.c.b16 %v3146, %v3144
    %v3293 = vpack.c.b16 %v3147, %v3145
    %v3294 = vpack.c.b16 %v3150, %v3148
    %v3295 = vpack.c.b16 %v3151, %v3149
    %v3296 = vpack.c.b16 %v3154, %v3152
    %v3297 = vpack.c.b16 %v3155, %v3153
    %v3298 = vpack.c.b16 %v3158, %v3156
    %v3299 = vpack.c.b16 %v3159, %v3157
    %v3300 = vpack.c.b16 %v3162, %v3160
    %v3301 = vpack.c.b16 %v3163, %v3161
    %v3302 = vpack.c.b16 %v3166, %v3164
    %v3303 = vpack.c.b16 %v3167, %v3165
    %v3304 = vpack.c.b16 %v3170, %v3168
    %v3305 = vpack.c.b16 %v3171, %v3169
    %v3306 = vpack.c.b16 %v3174, %v3172
    %v3307 = vpack.c.b16 %v3175, %v3173
    %v3308 = vpack.c.b16 %v3178, %v3176
    %v3309 = vpack.c.b16 %v3179, %v3177
    %v3310 = vpack.c.b16 %v3182, %v3180
    %v3311 = vpack.c.b16 %v3183, %v3181
    %3440 = vmatprep.subr.bf16.mxu0 %v3185
    %3441 = vmatpush1.bf16.msra.mxu0 %v3184
    %3442 = vmatprep.subr.bf16.mxu0 %v3187
    %3443 = vmatpush1.bf16.msra.mxu0 %v3186
    %3444 = vmatprep.subr.bf16.mxu0 %v3189
    %3445 = vmatpush1.bf16.msra.mxu0 %v3188
    %3446 = vmatprep.subr.bf16.mxu0 %v3191
    %3447 = vmatpush1.bf16.msra.mxu0 %v3190
    %3448 = vmatprep.subr.bf16.mxu0 %v3193
    %3449 = vmatpush1.bf16.msra.mxu0 %v3192
    %3450 = vmatprep.subr.bf16.mxu0 %v3195
    %3451 = vmatpush1.bf16.msra.mxu0 %v3194
    %3452 = vmatprep.subr.bf16.mxu0 %v3197
    %3453 = vmatpush1.bf16.msra.mxu0 %v3196
    %3454 = vmatprep.subr.bf16.mxu0 %v3199
    %3455 = vmatpush1.bf16.msra.mxu0 %v3198
    %3456 = vmatprep.subr.bf16.mxu0 %v3201
    %3457 = vmatpush1.bf16.msra.mxu0 %v3200
    %3458 = vmatprep.subr.bf16.mxu0 %v3203
    %3459 = vmatpush1.bf16.msra.mxu0 %v3202
    %3460 = vmatprep.subr.bf16.mxu0 %v3205
    %3461 = vmatpush1.bf16.msra.mxu0 %v3204
    %3462 = vmatprep.subr.bf16.mxu0 %v3207
    %3463 = vmatpush1.bf16.msra.mxu0 %v3206
    %3464 = vmatprep.subr.bf16.mxu0 %v3209
    %3465 = vmatpush1.bf16.msra.mxu0 %v3208
    %3466 = vmatprep.subr.bf16.mxu0 %v3211
    %3467 = vmatpush1.bf16.msra.mxu0 %v3210
    %3468 = vmatprep.subr.bf16.mxu0 %v3213
    %3469 = vmatpush1.bf16.msra.mxu0 %v3212
    %3470 = vmatprep.subr.bf16.mxu0 %v3215
    %3471 = vmatpush1.bf16.msra.mxu0 %v3214
    %3472 = vmatprep.mubr.bf16.mxu0 %v2653
    %3473 = vmatmul.mubr.bf16.gmra.mrb[0].mxu0 %v2652
    %v3474 = vpop.f32.mrb[0].mxu0
    %v3475 = vadd.f32 %v2793, %v3474
    %v3476 = vpop.f32.mrb[0].mxu0
    %v3477 = vadd.f32 %v2797, %v3476
    %v3478 = vpop.f32.mrb[0].mxu0
    %v3479 = vpop.f32.mrb[0].mxu0
    %3480 = vdwg.mxu0
    %3481 = vmatprep.subr.bf16.mxu0 %v3217
    %3482 = vmatpush1.bf16.msra.mxu0 %v3216
    %3483 = vmatprep.subr.bf16.mxu0 %v3219
    %3484 = vmatpush1.bf16.msra.mxu0 %v3218
    %3485 = vmatprep.subr.bf16.mxu0 %v3221
    %3486 = vmatpush1.bf16.msra.mxu0 %v3220
    %3487 = vmatprep.subr.bf16.mxu0 %v3223
    %3488 = vmatpush1.bf16.msra.mxu0 %v3222
    %3489 = vmatprep.subr.bf16.mxu0 %v3225
    %3490 = vmatpush1.bf16.msra.mxu0 %v3224
    %3491 = vmatprep.subr.bf16.mxu0 %v3227
    %3492 = vmatpush1.bf16.msra.mxu0 %v3226
    %3493 = vmatprep.subr.bf16.mxu0 %v3229
    %3494 = vmatpush1.bf16.msra.mxu0 %v3228
    %3495 = vmatprep.subr.bf16.mxu0 %v3231
    %3496 = vmatpush1.bf16.msra.mxu0 %v3230
    %3497 = vmatprep.subr.bf16.mxu0 %v3233
    %3498 = vmatpush1.bf16.msra.mxu0 %v3232
    %3499 = vmatprep.subr.bf16.mxu0 %v3235
    %3500 = vmatpush1.bf16.msra.mxu0 %v3234
    %3501 = vmatprep.subr.bf16.mxu0 %v3237
    %3502 = vmatpush1.bf16.msra.mxu0 %v3236
    %3503 = vmatprep.subr.bf16.mxu0 %v3239
    %3504 = vmatpush1.bf16.msra.mxu0 %v3238
    %3505 = vmatprep.subr.bf16.mxu0 %v3241
    %3506 = vmatpush1.bf16.msra.mxu0 %v3240
    %3507 = vmatprep.subr.bf16.mxu0 %v3243
    %3508 = vmatpush1.bf16.msra.mxu0 %v3242
    %3509 = vmatprep.subr.bf16.mxu0 %v3245
    %3510 = vmatpush1.bf16.msra.mxu0 %v3244
    %3511 = vmatprep.subr.bf16.mxu0 %v3247
    %3512 = vmatpush1.bf16.msra.mxu0 %v3246
    %3513 = vmatprep.mubr.bf16.mxu0 %v2655
    %3514 = vmatmul.mubr.bf16.gmra.mrb[0].mxu0 %v2654
    %v3515 = vpop.f32.mrb[0].mxu0
    %v3516 = vadd.f32 %v3475, %v3515
    %v3517 = vpop.f32.mrb[0].mxu0
    %v3518 = vadd.f32 %v3477, %v3517
    %v3519 = vpop.f32.mrb[0].mxu0
    %v3520 = vpop.f32.mrb[0].mxu0
    %3521 = vdwg.mxu0
    %3522 = vmatprep.subr.bf16.mxu0 %v3249
    %3523 = vmatpush1.bf16.msra.mxu0 %v3248
    %3524 = vmatprep.subr.bf16.mxu0 %v3251
    %3525 = vmatpush1.bf16.msra.mxu0 %v3250
    %3526 = vmatprep.subr.bf16.mxu0 %v3253
    %3527 = vmatpush1.bf16.msra.mxu0 %v3252
    %3528 = vmatprep.subr.bf16.mxu0 %v3255
    %3529 = vmatpush1.bf16.msra.mxu0 %v3254
    %3530 = vmatprep.subr.bf16.mxu0 %v3257
    %3531 = vmatpush1.bf16.msra.mxu0 %v3256
    %3532 = vmatprep.subr.bf16.mxu0 %v3259
    %3533 = vmatpush1.bf16.msra.mxu0 %v3258
    %3534 = vmatprep.subr.bf16.mxu0 %v3261
    %3535 = vmatpush1.bf16.msra.mxu0 %v3260
    %3536 = vmatprep.subr.bf16.mxu0 %v3263
    %3537 = vmatpush1.bf16.msra.mxu0 %v3262
    %3538 = vmatprep.subr.bf16.mxu0 %v3265
    %3539 = vmatpush1.bf16.msra.mxu0 %v3264
    %3540 = vmatprep.subr.bf16.mxu0 %v3267
    %3541 = vmatpush1.bf16.msra.mxu0 %v3266
    %3542 = vmatprep.subr.bf16.mxu0 %v3269
    %3543 = vmatpush1.bf16.msra.mxu0 %v3268
    %3544 = vmatprep.subr.bf16.mxu0 %v3271
    %3545 = vmatpush1.bf16.msra.mxu0 %v3270
    %3546 = vmatprep.subr.bf16.mxu0 %v3273
    %3547 = vmatpush1.bf16.msra.mxu0 %v3272
    %3548 = vmatprep.subr.bf16.mxu0 %v3275
    %3549 = vmatpush1.bf16.msra.mxu0 %v3274
    %3550 = vmatprep.subr.bf16.mxu0 %v3277
    %3551 = vmatpush1.bf16.msra.mxu0 %v3276
    %3552 = vmatprep.subr.bf16.mxu0 %v3279
    %3553 = vmatpush1.bf16.msra.mxu0 %v3278
    %3554 = vmatprep.mubr.bf16.mxu0 %v2657
    %3555 = vmatmul.mubr.bf16.gmra.mrb[0].mxu0 %v2656
    %v3556 = vpop.f32.mrb[0].mxu0
    %v3557 = vadd.f32 %v3516, %v3556
    %v3558 = vpop.f32.mrb[0].mxu0
    %v3559 = vadd.f32 %v3518, %v3558
    %v3560 = vpop.f32.mrb[0].mxu0
    %v3561 = vpop.f32.mrb[0].mxu0
    %3562 = vdwg.mxu0
    %3563 = vmatprep.subr.bf16.mxu0 %v3281
    %3564 = vmatpush1.bf16.msra.mxu0 %v3280
    %3565 = vmatprep.subr.bf16.mxu0 %v3283
    %3566 = vmatpush1.bf16.msra.mxu0 %v3282
    %3567 = vmatprep.subr.bf16.mxu0 %v3285
    %3568 = vmatpush1.bf16.msra.mxu0 %v3284
    %3569 = vmatprep.subr.bf16.mxu0 %v3287
    %3570 = vmatpush1.bf16.msra.mxu0 %v3286
    %3571 = vmatprep.subr.bf16.mxu0 %v3289
    %3572 = vmatpush1.bf16.msra.mxu0 %v3288
    %3573 = vmatprep.subr.bf16.mxu0 %v3291
    %3574 = vmatpush1.bf16.msra.mxu0 %v3290
    %3575 = vmatprep.subr.bf16.mxu0 %v3293
    %3576 = vmatpush1.bf16.msra.mxu0 %v3292
    %3577 = vmatprep.subr.bf16.mxu0 %v3295
    %3578 = vmatpush1.bf16.msra.mxu0 %v3294
    %3579 = vmatprep.subr.bf16.mxu0 %v3297
    %3580 = vmatpush1.bf16.msra.mxu0 %v3296
    %3581 = vmatprep.subr.bf16.mxu0 %v3299
    %3582 = vmatpush1.bf16.msra.mxu0 %v3298
    %3583 = vmatprep.subr.bf16.mxu0 %v3301
    %3584 = vmatpush1.bf16.msra.mxu0 %v3300
    %3585 = vmatprep.subr.bf16.mxu0 %v3303
    %3586 = vmatpush1.bf16.msra.mxu0 %v3302
    %3587 = vmatprep.subr.bf16.mxu0 %v3305
    %3588 = vmatpush1.bf16.msra.mxu0 %v3304
    %3589 = vmatprep.subr.bf16.mxu0 %v3307
    %3590 = vmatpush1.bf16.msra.mxu0 %v3306
    %3591 = vmatprep.subr.bf16.mxu0 %v3309
    %3592 = vmatpush1.bf16.msra.mxu0 %v3308
    %3593 = vmatprep.subr.bf16.mxu0 %v3311
    %3594 = vmatpush1.bf16.msra.mxu0 %v3310
    %3595 = vmatprep.mubr.bf16.mxu0 %v2659
    %3596 = vmatmul.mubr.bf16.gmra.mrb[0].mxu0 %v2658
    %v3597 = vpop.f32.mrb[0].mxu0
    %v3598 = vadd.f32 %v3557, %v3597
    %v3599 = vpop.f32.mrb[0].mxu0
    %v3600 = vadd.f32 %v3559, %v3599
    %v3601 = vpop.f32.mrb[0].mxu0
    %v3602 = vpop.f32.mrb[0].mxu0
    %3603 = vdwg.mxu0
    %v3604 = vtanh.pop %v3598
    %v3605 = vtanh.pop %v3600
    %v3608 = vcombine.low %v3604, %v3605
    %v3610 = vunpack.c.l.s4 1983009808
    %v3611 = vunpack.c.0.s8 %v3610
    %v3612 = vlaneseq
    %v3613 = vshrl.u32 %v3612, 7
    %v3614 = vsub.s32 %v3611, %v3613
    %v3615 = vrot.slane %v3608, %v3614
    %3617 = vst [vmem:[%s9] sm:$0xf] %v3615
    // Predicated region
    $region54: #{forward.1} parent=1 // pred_check
      _
    $region55: #{forward.1} parent=1 // pred_check_branch
      %3619 = sbr.rel (0) target = $region57
    $region56: #{forward.1} parent=1 // pred_region
      _
    $region57: #{forward.1} parent=1 // pred_fallthru
      _
    // Predicated region
    $region58: #{forward.1} parent=1 // pred_check
      _
    $region59: #{forward.1} parent=1 // pred_check_branch
      %3621 = sbr.rel (0) target = $region61
    $region60: #{forward.1} parent=1 // pred_region
      _
    $region61: #{forward.1} parent=1 // pred_fallthru
      _
    %3622 = vsyncpa [#allocation3], 1
    %3623 = vsyncpa [#allocation5], 1
    %3624 = vsyncpa [#allocation8], 1

</llo_original>
